<compile_context>
chip_gen: v7x
topology: tpu7x:2x2x1
jax: 0.10.0
libtpu: 0.0.40
codegen_flags: <defaults>
</compile_context>

<pallas_src>
import functools

import jax
import jax.numpy as jnp
from jax.experimental import pallas as pl
from jax.experimental.pallas import tpu as pltpu

IN_DIM = 28 * 28   # 784
HID = 512
OUT_DIM = 10
OUT_PAD = 128      # lane-dense output columns (unmasked vst); sliced back to 10


def _round_up(x, m):
    return (x + m - 1) // m * m


def _sigmoid(x):
    # sigmoid(x) = 0.5*tanh(0.5*x) + 0.5 — a single EUP op per element.
    return 0.5 * jnp.tanh(0.5 * x) + 0.5


def mlp_kernel(x_ref, w1_ref, b1_ref, w2_ref, b2_ref, w3_ref, b3_ref, o_ref):
    cdt = w1_ref.dtype                           # compute dtype (bf16 or f32)
    # In-kernel cast of the raw f32 input (cheap VPU work, hidden under MXU);
    # avoids a separate wrapper-side pad/cast pass over x in HBM.
    x = x_ref[...].astype(cdt)                   # (TB, 784)
    z1 = jnp.dot(x, w1_ref[...], preferred_element_type=jnp.float32) + b1_ref[...]
    h1 = _sigmoid(z1.astype(cdt))                # bf16 tanh: 2x EUP on v6e/v7x
    z2 = jnp.dot(h1, w2_ref[...], preferred_element_type=jnp.float32) + b2_ref[...]
    h2 = _sigmoid(z2.astype(cdt))
    z3 = jnp.dot(h2, w3_ref[...], preferred_element_type=jnp.float32) + b3_ref[...]
    y = _sigmoid(z3)                             # only 128 cols: keep f32 here
    o_ref[...] = y.astype(o_ref.dtype)           # lane-dense (TB, 128) store


def pack_params(params, compute_dtype=jnp.bfloat16):
    """One-time weight reformat (pad 10->128 cols, cast, reshape biases).

    Done outside the jitted forward so per-call overhead is just the kernel.
    """
    return {
        "w1": params["w1"].astype(compute_dtype),                       # (784, 512)
        "w2": params["w2"].astype(compute_dtype),                       # (512, 512)
        "w3": jnp.pad(params["w3"], ((0, 0), (0, OUT_PAD - OUT_DIM))
                      ).astype(compute_dtype),                          # (512, 128)
        "b1": params["b1"].reshape(1, HID).astype(jnp.float32),
        "b2": params["b2"].reshape(1, HID).astype(jnp.float32),
        "b3": jnp.pad(params["b3"], (0, OUT_PAD - OUT_DIM)
                      ).reshape(1, OUT_PAD).astype(jnp.float32),
    }


@functools.partial(jax.jit, static_argnames=("block_b",))
def neural_network_forward(x_nchw, packed, *, block_b=1024):
    """Forward pass matching the PyTorch NeuralNetwork module.

    x_nchw: (B, 1, 28, 28) float32 (NCHW, as in PyTorch).
    packed: output of pack_params().
    returns: (B, 10) float32.
    """
    B = x_nchw.shape[0]
    x = x_nchw.reshape(B, -1)                    # nn.Flatten()
    assert x.shape[1] == IN_DIM

    cdt = packed["w1"].dtype
    out_dtype = cdt if cdt == jnp.bfloat16 else jnp.float32

    # --- tile bookkeeping (Python ints, runs at trace time) -----------------
    pack = 16                                    # bf16 sublane packing (ok for f32 too)
    tb = _round_up(min(block_b, _round_up(B, pack)), pack)
    # v7x has 2 TensorCores sharing the "parallel" batch axis: make sure the
    # grid has >= 2 steps whenever the batch is big enough to split.
    if B > pack and _round_up(B, tb) // tb < 2:
        tb = _round_up(pl.cdiv(B, 2), pack)
    padded_b = _round_up(B, tb)
    grid = (padded_b // tb,)

    if padded_b != B:                            # batch-only pad (<= tb-1 rows)
        x = jnp.pad(x, ((0, padded_b - B), (0, 0)))

    const = lambda i: (0, 0)                     # weights/biases: VMEM-resident
    out = pl.pallas_call(
        mlp_kernel,
        out_shape=jax.ShapeDtypeStruct((padded_b, OUT_PAD), out_dtype),
        grid=grid,
        in_specs=[
            pl.BlockSpec((tb, IN_DIM), lambda i: (i, 0)),   # raw f32 x, batch-tiled
            pl.BlockSpec((IN_DIM, HID), const),             # w1
            pl.BlockSpec((1, HID), const),                  # b1
            pl.BlockSpec((HID, HID), const),                # w2
            pl.BlockSpec((1, HID), const),                  # b2
            pl.BlockSpec((HID, OUT_PAD), const),            # w3 (padded to 128 cols)
            pl.BlockSpec((1, OUT_PAD), const),              # b3
        ],
        out_specs=pl.BlockSpec((tb, OUT_PAD), lambda i: (i, 0)),  # lane-dense store
        compiler_params=pltpu.CompilerParams(
            dimension_semantics=("parallel",),   # megacore / v7x dual-TC sharding
            vmem_limit_bytes=48 << 20,           # v5e default (16 MiB) too small at tb=1024
        ),
    )(x, packed["w1"], packed["b1"], packed["w2"], packed["b2"],
      packed["w3"], packed["b3"])

    return out[:B, :OUT_DIM].astype(jnp.float32)


def init_params(key):
    """Deterministic init mimicking nn.Linear default (uniform +/- 1/sqrt(fan_in))."""
    ks = jax.random.split(key, 6)

    def lin(kw, kb, fan_in, fan_out):
        bound = 1.0 / jnp.sqrt(fan_in)
        w = jax.random.uniform(kw, (fan_in, fan_out), jnp.float32, -bound, bound)
        b = jax.random.uniform(kb, (fan_out,), jnp.float32, -bound, bound)
        return w, b

    w1, b1 = lin(ks[0], ks[1], IN_DIM, HID)
    w2, b2 = lin(ks[2], ks[3], HID, HID)
    w3, b3 = lin(ks[4], ks[5], HID, OUT_DIM)
    return {"w1": w1, "b1": b1, "w2": w2, "b2": b2, "w3": w3, "b3": b3}


def reference_forward(x_nchw, params):
    x = x_nchw.reshape(x_nchw.shape[0], -1)
    h = jax.nn.sigmoid(x @ params["w1"] + params["b1"])
    h = jax.nn.sigmoid(h @ params["w2"] + params["b2"])
    return jax.nn.sigmoid(h @ params["w3"] + params["b3"])


if __name__ == "__main__":
    key = jax.random.PRNGKey(0)
    k_params, k_x = jax.random.split(key)
    params = init_params(k_params)

    B = 8
    x = jax.random.normal(k_x, (B, 1, 28, 28), dtype=jnp.float32)  # NCHW input

    ref = reference_forward(x, params)

    # Fast path: bf16 operands + bf16 tanh, f32 MXU accumulation (v6e/v7x).
    packed_bf16 = pack_params(params, jnp.bfloat16)
    out_bf16 = jax.block_until_ready(neural_network_forward(x, packed_bf16))
    assert out_bf16.shape == (B, OUT_DIM)
    assert jnp.allclose(out_bf16, ref, atol=4e-2), float(jnp.max(jnp.abs(out_bf16 - ref)))

    # Full-precision path (f32 everywhere, exact tanh-based sigmoid).
    packed_f32 = pack_params(params, jnp.float32)
    out_f32 = jax.block_until_ready(neural_network_forward(x, packed_f32))
    assert out_f32.shape == (B, OUT_DIM)
    assert jnp.allclose(out_f32, ref, atol=1e-3), float(jnp.max(jnp.abs(out_f32 - ref)))

    print("KERNEL_OK")
</pallas_src>

<mosaic_0001>
module attributes {stable_mosaic.version = 11 : i64} {
  func.func @mlp_kernel(%arg0: i32, %arg1: memref<16x784xf32, #tpu.memory_space<vmem>>, %arg2: memref<784x512xbf16, #tpu.memory_space<vmem>>, %arg3: memref<1x512xf32, #tpu.memory_space<vmem>>, %arg4: memref<512x512xbf16, #tpu.memory_space<vmem>>, %arg5: memref<1x512xf32, #tpu.memory_space<vmem>>, %arg6: memref<512x128xbf16, #tpu.memory_space<vmem>>, %arg7: memref<1x128xf32, #tpu.memory_space<vmem>>, %arg8: memref<16x128xbf16, #tpu.memory_space<vmem>>) attributes {dimension_semantics = [#tpu.dimension_semantics<parallel>], iteration_bounds = array<i64: 1>, scalar_prefetch = 0 : i64, scratch_operands = 0 : i64, tpu.core_type = #tpu.core_type<tc>, window_params = [{transform_indices = @transform_0, window_bounds = array<i64: 16, 784>}, {pipeline_mode = #tpu.pipeline_mode<synchronous>, transform_indices = @transform_1, window_bounds = array<i64: 784, 512>}, {pipeline_mode = #tpu.pipeline_mode<synchronous>, transform_indices = @transform_2, window_bounds = array<i64: 1, 512>}, {pipeline_mode = #tpu.pipeline_mode<synchronous>, transform_indices = @transform_3, window_bounds = array<i64: 512, 512>}, {pipeline_mode = #tpu.pipeline_mode<synchronous>, transform_indices = @transform_4, window_bounds = array<i64: 1, 512>}, {pipeline_mode = #tpu.pipeline_mode<synchronous>, transform_indices = @transform_5, window_bounds = array<i64: 512, 128>}, {pipeline_mode = #tpu.pipeline_mode<synchronous>, transform_indices = @transform_6, window_bounds = array<i64: 1, 128>}, {transform_indices = @transform_7, window_bounds = array<i64: 16, 128>}]} {
    %c0 = arith.constant 0 : index
    %c0_0 = arith.constant 0 : index
    %0 = vector.load %arg1[%c0, %c0_0] : memref<16x784xf32, #tpu.memory_space<vmem>>, vector<16x784xf32>
    %1 = arith.truncf %0 : vector<16x784xf32> to vector<16x784xbf16>
    %c0_1 = arith.constant 0 : index
    %c0_2 = arith.constant 0 : index
    %2 = vector.load %arg2[%c0_1, %c0_2] : memref<784x512xbf16, #tpu.memory_space<vmem>>, vector<784x512xbf16>
    %cst = arith.constant dense<0.000000e+00> : vector<16x512xf32>
    %3 = tpu.matmul %1, %2, %cst {dimension_numbers = #tpu.dot_dimension_numbers<[1], [0], [0], [1], [0, 0, 1, 1], [], []>} : vector<16x784xbf16>, vector<784x512xbf16>, vector<16x512xf32> -> vector<16x512xf32>
    %c0_3 = arith.constant 0 : index
    %c0_4 = arith.constant 0 : index
    %4 = vector.load %arg3[%c0_3, %c0_4] : memref<1x512xf32, #tpu.memory_space<vmem>>, vector<1x512xf32>
    %5 = vector.broadcast %4 : vector<1x512xf32> to vector<16x512xf32>
    %6 = arith.addf %3, %5 : vector<16x512xf32>
    %7 = arith.truncf %6 : vector<16x512xf32> to vector<16x512xbf16>
    %cst_5 = arith.constant 5.000000e-01 : bf16
    %8 = vector.broadcast %cst_5 : bf16 to vector<16x512xbf16>
    %9 = arith.mulf %8, %7 : vector<16x512xbf16>
    %10 = math.tanh %9 : vector<16x512xbf16>
    %cst_6 = arith.constant 5.000000e-01 : bf16
    %11 = vector.broadcast %cst_6 : bf16 to vector<16x512xbf16>
    %12 = arith.mulf %11, %10 : vector<16x512xbf16>
    %cst_7 = arith.constant 5.000000e-01 : bf16
    %13 = vector.broadcast %cst_7 : bf16 to vector<16x512xbf16>
    %14 = arith.addf %12, %13 : vector<16x512xbf16>
    %c0_8 = arith.constant 0 : index
    %c0_9 = arith.constant 0 : index
    %15 = vector.load %arg4[%c0_8, %c0_9] : memref<512x512xbf16, #tpu.memory_space<vmem>>, vector<512x512xbf16>
    %cst_10 = arith.constant dense<0.000000e+00> : vector<16x512xf32>
    %16 = tpu.matmul %14, %15, %cst_10 {dimension_numbers = #tpu.dot_dimension_numbers<[1], [0], [0], [1], [0, 0, 1, 1], [], []>} : vector<16x512xbf16>, vector<512x512xbf16>, vector<16x512xf32> -> vector<16x512xf32>
    %c0_11 = arith.constant 0 : index
    %c0_12 = arith.constant 0 : index
    %17 = vector.load %arg5[%c0_11, %c0_12] : memref<1x512xf32, #tpu.memory_space<vmem>>, vector<1x512xf32>
    %18 = vector.broadcast %17 : vector<1x512xf32> to vector<16x512xf32>
    %19 = arith.addf %16, %18 : vector<16x512xf32>
    %20 = arith.truncf %19 : vector<16x512xf32> to vector<16x512xbf16>
    %cst_13 = arith.constant 5.000000e-01 : bf16
    %21 = vector.broadcast %cst_13 : bf16 to vector<16x512xbf16>
    %22 = arith.mulf %21, %20 : vector<16x512xbf16>
    %23 = math.tanh %22 : vector<16x512xbf16>
    %cst_14 = arith.constant 5.000000e-01 : bf16
    %24 = vector.broadcast %cst_14 : bf16 to vector<16x512xbf16>
    %25 = arith.mulf %24, %23 : vector<16x512xbf16>
    %cst_15 = arith.constant 5.000000e-01 : bf16
    %26 = vector.broadcast %cst_15 : bf16 to vector<16x512xbf16>
    %27 = arith.addf %25, %26 : vector<16x512xbf16>
    %c0_16 = arith.constant 0 : index
    %c0_17 = arith.constant 0 : index
    %28 = vector.load %arg6[%c0_16, %c0_17] : memref<512x128xbf16, #tpu.memory_space<vmem>>, vector<512x128xbf16>
    %cst_18 = arith.constant dense<0.000000e+00> : vector<16x128xf32>
    %29 = tpu.matmul %27, %28, %cst_18 {dimension_numbers = #tpu.dot_dimension_numbers<[1], [0], [0], [1], [0, 0, 1, 1], [], []>} : vector<16x512xbf16>, vector<512x128xbf16>, vector<16x128xf32> -> vector<16x128xf32>
    %c0_19 = arith.constant 0 : index
    %c0_20 = arith.constant 0 : index
    %30 = vector.load %arg7[%c0_19, %c0_20] : memref<1x128xf32, #tpu.memory_space<vmem>>, vector<1x128xf32>
    %31 = vector.broadcast %30 : vector<1x128xf32> to vector<16x128xf32>
    %32 = arith.addf %29, %31 : vector<16x128xf32>
    %cst_21 = arith.constant 5.000000e-01 : f32
    %33 = vector.broadcast %cst_21 : f32 to vector<16x128xf32>
    %34 = arith.mulf %33, %32 : vector<16x128xf32>
    %35 = math.tanh %34 : vector<16x128xf32>
    %cst_22 = arith.constant 5.000000e-01 : f32
    %36 = vector.broadcast %cst_22 : f32 to vector<16x128xf32>
    %37 = arith.mulf %36, %35 : vector<16x128xf32>
    %cst_23 = arith.constant 5.000000e-01 : f32
    %38 = vector.broadcast %cst_23 : f32 to vector<16x128xf32>
    %39 = arith.addf %37, %38 : vector<16x128xf32>
    %40 = arith.truncf %39 : vector<16x128xf32> to vector<16x128xbf16>
    %c0_24 = arith.constant 0 : index
    %c0_25 = arith.constant 0 : index
    %41 = vector.load %arg8[%c0_24, %c0_25] : memref<16x128xbf16, #tpu.memory_space<vmem>>, vector<16x128xbf16>
    tpu.vector_store %arg8[%c0_24, %c0_25], %40 {strides = array<i32>} : memref<16x128xbf16, #tpu.memory_space<vmem>>, vector<16x128xbf16>,
    return
  }
  func.func @transform_0(%arg0: i32) -> (i32, i32) {
    %c0_i32 = arith.constant 0 : i32
    %c0_i32_0 = arith.constant 0 : i32
    return %arg0, %c0_i32 : i32, i32
  }
  func.func @transform_1(%arg0: i32) -> (i32, i32) {
    %c0_i32 = arith.constant 0 : i32
    %c0_i32_0 = arith.constant 0 : i32
    %c0_i32_1 = arith.constant 0 : i32
    return %c0_i32, %c0_i32_0 : i32, i32
  }
  func.func @transform_2(%arg0: i32) -> (i32, i32) {
    %c0_i32 = arith.constant 0 : i32
    %c0_i32_0 = arith.constant 0 : i32
    %c0_i32_1 = arith.constant 0 : i32
    return %c0_i32, %c0_i32_0 : i32, i32
  }
  func.func @transform_3(%arg0: i32) -> (i32, i32) {
    %c0_i32 = arith.constant 0 : i32
    %c0_i32_0 = arith.constant 0 : i32
    %c0_i32_1 = arith.constant 0 : i32
    return %c0_i32, %c0_i32_0 : i32, i32
  }
  func.func @transform_4(%arg0: i32) -> (i32, i32) {
    %c0_i32 = arith.constant 0 : i32
    %c0_i32_0 = arith.constant 0 : i32
    %c0_i32_1 = arith.constant 0 : i32
    return %c0_i32, %c0_i32_0 : i32, i32
  }
  func.func @transform_5(%arg0: i32) -> (i32, i32) {
    %c0_i32 = arith.constant 0 : i32
    %c0_i32_0 = arith.constant 0 : i32
    %c0_i32_1 = arith.constant 0 : i32
    return %c0_i32, %c0_i32_0 : i32, i32
  }
  func.func @transform_6(%arg0: i32) -> (i32, i32) {
    %c0_i32 = arith.constant 0 : i32
    %c0_i32_0 = arith.constant 0 : i32
    %c0_i32_1 = arith.constant 0 : i32
    return %c0_i32, %c0_i32_0 : i32, i32
  }
  func.func @transform_7(%arg0: i32) -> (i32, i32) {
    %c0_i32 = arith.constant 0 : i32
    %c0_i32_0 = arith.constant 0 : i32
    return %arg0, %c0_i32 : i32, i32
  }
}

</mosaic_0001>

<llo_original>
// kernel: neural_network_forward.1
$region0: #{neural_network_forward.1}
  #allocation0 [shape = 'u32[]', space=smem, size = 0x4, offset = 0x4, fixed_abs, tag = 'smem constant byte address 0x4 - core index']
  #allocation1 [shape = 'u32[144,128]{1,0:T(1,128)}', space=vmem, size = 0x12000, scoped, tag = 'internal scratch']
  %s0 = inlined_call_operand.vmem [shape: f32[16,784], index: 0, kind: input, shape index: {}]
  %s1 = inlined_call_operand.hbm [shape: bf16[784,512], index: 1, kind: input, shape index: {}]
  %s2 = inlined_call_operand.vmem [shape: f32[1,512], index: 2, kind: input, shape index: {}]
  %s3 = inlined_call_operand.hbm [shape: bf16[512,512], index: 3, kind: input, shape index: {}]
  %s4 = inlined_call_operand.vmem [shape: f32[1,512], index: 4, kind: input, shape index: {}]
  %s5 = inlined_call_operand.vmem [shape: bf16[512,128], index: 5, kind: input, shape index: {}]
  %s6 = inlined_call_operand.vmem [shape: f32[1,128], index: 6, kind: input, shape index: {}]
  %s7 = inlined_call_operand.vmem [shape: bf16[16,128], index: 7, kind: output, shape index: {}]
  %s8 = sld [smem:[#allocation0]]
  $region46: #{neural_network_forward.1} parent=0
    _
  %s10 = ssub.s32 1, %s8
  %s11 = scalar_select 0, %s10, %s8
  $region1: #{neural_network_forward.1} parent=0
    #allocation2 [shape = 'u8[802816]{0}', space=vmem, size = 0xc4000, scoped, tag = 'input window, operand 1, single buffered']
    #allocation3 [shape = 's32[1]{0}', space=sflag, size = 0x4, scoped, tag = 'scoped memory for neural_network_forward.1']
    #allocation4 [shape = 'u8[524288]{0}', space=vmem, size = 0x80000, scoped, tag = 'input window, operand 3, single buffered']
    #allocation5 [shape = 's32[1]{0}', space=sflag, size = 0x4, scoped, tag = 'scoped memory for neural_network_forward.1']
    %12 = vsyncpa [#allocation3], 0
    %13 = vsyncpa [#allocation5], 0
    // Predicated region
    $region2: #{neural_network_forward.1} parent=1 // pred_check
      _
    $region3: #{neural_network_forward.1} parent=1 // pred_check_branch
      %15 = sbr.rel (0) target = $region5
    $region4: #{neural_network_forward.1} parent=1 // pred_region
      _
    $region5: #{neural_network_forward.1} parent=1 // pred_fallthru
      _
    // Predicated region
    $region6: #{neural_network_forward.1} parent=1 // pred_check
      _
    $region7: #{neural_network_forward.1} parent=1 // pred_check_branch
      %17 = sbr.rel (0) target = $region9
    $region8: #{neural_network_forward.1} parent=1 // pred_region
      %s19 = ssub.s32 25088, 25088
      %20 = vsyncadd [#allocation3], %s19
      %s21 = sshll.u32 [#allocation2], 4
      %s22 = int_to_ptr.vmem [resolvable:$true] %s21
      %27 = dma.hbm_to_vmem [thread:$0]  %s1, 25088, %s22, [#allocation3], 256, 256, 16
    $region9: #{neural_network_forward.1} parent=1 // pred_fallthru
      _
    // Predicated region
    $region10: #{neural_network_forward.1} parent=1 // pred_check
      _
    $region11: #{neural_network_forward.1} parent=1 // pred_check_branch
      %29 = sbr.rel (0) target = $region13
    $region12: #{neural_network_forward.1} parent=1 // pred_region
      _
    $region13: #{neural_network_forward.1} parent=1 // pred_fallthru
      _
    // Predicated region
    $region14: #{neural_network_forward.1} parent=1 // pred_check
      _
    $region15: #{neural_network_forward.1} parent=1 // pred_check_branch
      %31 = sbr.rel (0) target = $region17
    $region16: #{neural_network_forward.1} parent=1 // pred_region
      %s33 = ssub.s32 16384, 16384
      %34 = vsyncadd [#allocation5], %s33
      %s35 = sshll.u32 [#allocation4], 4
      %s36 = int_to_ptr.vmem [resolvable:$true] %s35
      %41 = dma.hbm_to_vmem [thread:$0]  %s3, 16384, %s36, [#allocation5], 256, 256, 16
    $region17: #{neural_network_forward.1} parent=1 // pred_fallthru
      _
    // Predicated region
    $region18: #{neural_network_forward.1} parent=1 // pred_check
      _
    $region19: #{neural_network_forward.1} parent=1 // pred_check_branch
      %43 = sbr.rel (0) target = $region21
    $region20: #{neural_network_forward.1} parent=1 // pred_region
      _
    $region21: #{neural_network_forward.1} parent=1 // pred_fallthru
      _
    // Predicated region
    $region22: #{neural_network_forward.1} parent=1 // pred_check
      _
    $region23: #{neural_network_forward.1} parent=1 // pred_check_branch
      %45 = sbr.rel (0) target = $region25
    $region24: #{neural_network_forward.1} parent=1 // pred_region
      _
    $region25: #{neural_network_forward.1} parent=1 // pred_fallthru
      _
    // Predicated region
    $region26: #{neural_network_forward.1} parent=1 // pred_check
      _
    $region27: #{neural_network_forward.1} parent=1 // pred_check_branch
      %47 = sbr.rel (0) target = $region29
    $region28: #{neural_network_forward.1} parent=1 // pred_region
      _
    $region29: #{neural_network_forward.1} parent=1 // pred_fallthru
      _
    // Predicated region
    $region30: #{neural_network_forward.1} parent=1 // pred_check
      _
    $region31: #{neural_network_forward.1} parent=1 // pred_check_branch
      %49 = sbr.rel (0) target = $region33
    $region32: #{neural_network_forward.1} parent=1 // pred_region
      %50 = dma.done [#allocation3], 25088
    $region33: #{neural_network_forward.1} parent=1 // pred_fallthru
      _
    // Predicated region
    $region34: #{neural_network_forward.1} parent=1 // pred_check
      _
    $region35: #{neural_network_forward.1} parent=1 // pred_check_branch
      %52 = sbr.rel (0) target = $region37
    $region36: #{neural_network_forward.1} parent=1 // pred_region
      %53 = dma.done [#allocation5], 16384
    $region37: #{neural_network_forward.1} parent=1 // pred_fallthru
      _
    %v56 = vld [vmem:[%s0] sm:$0xff]
    %v57 = vld [vmem:[%s0 + $0x8] sm:$0xff]
    %v58 = vld [vmem:[%s0 + $0x10] sm:$0xff]
    %v59 = vld [vmem:[%s0 + $0x18] sm:$0xff]
    %v60 = vld [vmem:[%s0 + $0x20] sm:$0xff]
    %v61 = vld [vmem:[%s0 + $0x28] sm:$0xff]
    %v62 = vld [vmem:[%s0 + $0x30] sm:$0xff]
    %v63 = vld [vmem:[%s0 + $0x38] sm:$0xff]
    %v64 = vld [vmem:[%s0 + $0x40] sm:$0xff]
    %v65 = vld [vmem:[%s0 + $0x48] sm:$0xff]
    %v66 = vld [vmem:[%s0 + $0x50] sm:$0xff]
    %v67 = vld [vmem:[%s0 + $0x58] sm:$0xff]
    %v68 = vld [vmem:[%s0 + $0x60] sm:$0xff]
    %v69 = vld [vmem:[%s0 + $0x68] sm:$0xff]
    %v70 = vpack.c.bf16 %v63, %v56
    %v71 = vpack.c.bf16 %v64, %v57
    %v72 = vpack.c.bf16 %v65, %v58
    %v73 = vpack.c.bf16 %v66, %v59
    %v74 = vpack.c.bf16 %v67, %v60
    %v75 = vpack.c.bf16 %v68, %v61
    %v76 = vpack.c.bf16 %v69, %v62
    %v77 = vld [vmem:[#allocation2] sm:$0xff]
    %v78 = vld [vmem:[#allocation2 + $0x8] sm:$0xff]
    %v79 = vld [vmem:[#allocation2 + $0x10] sm:$0xff]
    %v80 = vld [vmem:[#allocation2 + $0x18] sm:$0xff]
    %v81 = vld [vmem:[#allocation2 + $0x20] sm:$0xff]
    %v82 = vld [vmem:[#allocation2 + $0x28] sm:$0xff]
    %v83 = vld [vmem:[#allocation2 + $0x30] sm:$0xff]
    %v84 = vld [vmem:[#allocation2 + $0x38] sm:$0xff]
    %v85 = vld [vmem:[#allocation2 + $0x40] sm:$0xff]
    %v86 = vld [vmem:[#allocation2 + $0x48] sm:$0xff]
    %v87 = vld [vmem:[#allocation2 + $0x50] sm:$0xff]
    %v88 = vld [vmem:[#allocation2 + $0x58] sm:$0xff]
    %v89 = vld [vmem:[#allocation2 + $0x60] sm:$0xff]
    %v90 = vld [vmem:[#allocation2 + $0x68] sm:$0xff]
    %v91 = vld [vmem:[#allocation2 + $0x70] sm:$0xff]
    %v92 = vld [vmem:[#allocation2 + $0x78] sm:$0xff]
    %v93 = vld [vmem:[#allocation2 + $0x80] sm:$0xff]
    %v94 = vld [vmem:[#allocation2 + $0x88] sm:$0xff]
    %v95 = vld [vmem:[#allocation2 + $0x90] sm:$0xff]
    %v96 = vld [vmem:[#allocation2 + $0x98] sm:$0xff]
    %v97 = vld [vmem:[#allocation2 + $0xa0] sm:$0xff]
    %v98 = vld [vmem:[#allocation2 + $0xa8] sm:$0xff]
    %v99 = vld [vmem:[#allocation2 + $0xb0] sm:$0xff]
    %v100 = vld [vmem:[#allocation2 + $0xb8] sm:$0xff]
    %v101 = vld [vmem:[#allocation2 + $0xc0] sm:$0xff]
    %v102 = vld [vmem:[#allocation2 + $0xc8] sm:$0xff]
    %v103 = vld [vmem:[#allocation2 + $0xd0] sm:$0xff]
    %v104 = vld [vmem:[#allocation2 + $0xd8] sm:$0xff]
    %v105 = vld [vmem:[#allocation2 + $0xe0] sm:$0xff]
    %v106 = vld [vmem:[#allocation2 + $0xe8] sm:$0xff]
    %v107 = vld [vmem:[#allocation2 + $0xf0] sm:$0xff]
    %v108 = vld [vmem:[#allocation2 + $0xf8] sm:$0xff]
    %v109 = vld [vmem:[#allocation2 + $0x100] sm:$0xff]
    %v110 = vld [vmem:[#allocation2 + $0x108] sm:$0xff]
    %v111 = vld [vmem:[#allocation2 + $0x110] sm:$0xff]
    %v112 = vld [vmem:[#allocation2 + $0x118] sm:$0xff]
    %v113 = vld [vmem:[#allocation2 + $0x120] sm:$0xff]
    %v114 = vld [vmem:[#allocation2 + $0x128] sm:$0xff]
    %v115 = vld [vmem:[#allocation2 + $0x130] sm:$0xff]
    %v116 = vld [vmem:[#allocation2 + $0x138] sm:$0xff]
    %v117 = vld [vmem:[#allocation2 + $0x140] sm:$0xff]
    %v118 = vld [vmem:[#allocation2 + $0x148] sm:$0xff]
    %v119 = vld [vmem:[#allocation2 + $0x150] sm:$0xff]
    %v120 = vld [vmem:[#allocation2 + $0x158] sm:$0xff]
    %v121 = vld [vmem:[#allocation2 + $0x160] sm:$0xff]
    %v122 = vld [vmem:[#allocation2 + $0x168] sm:$0xff]
    %v123 = vld [vmem:[#allocation2 + $0x170] sm:$0xff]
    %v124 = vld [vmem:[#allocation2 + $0x178] sm:$0xff]
    %v125 = vld [vmem:[#allocation2 + $0x180] sm:$0xff]
    %v126 = vld [vmem:[#allocation2 + $0x188] sm:$0xff]
    %v127 = vld [vmem:[#allocation2 + $0x190] sm:$0xff]
    %v128 = vld [vmem:[#allocation2 + $0x198] sm:$0xff]
    %v129 = vld [vmem:[#allocation2 + $0x1a0] sm:$0xff]
    %v130 = vld [vmem:[#allocation2 + $0x1a8] sm:$0xff]
    %v131 = vld [vmem:[#allocation2 + $0x1b0] sm:$0xff]
    %v132 = vld [vmem:[#allocation2 + $0x1b8] sm:$0xff]
    %v133 = vld [vmem:[#allocation2 + $0x1c0] sm:$0xff]
    %v134 = vld [vmem:[#allocation2 + $0x1c8] sm:$0xff]
    %v135 = vld [vmem:[#allocation2 + $0x1d0] sm:$0xff]
    %v136 = vld [vmem:[#allocation2 + $0x1d8] sm:$0xff]
    %v137 = vld [vmem:[#allocation2 + $0x1e0] sm:$0xff]
    %v138 = vld [vmem:[#allocation2 + $0x1e8] sm:$0xff]
    %v139 = vld [vmem:[#allocation2 + $0x1f0] sm:$0xff]
    %v140 = vld [vmem:[#allocation2 + $0x1f8] sm:$0xff]
    %v141 = vld [vmem:[#allocation2 + $0x200] sm:$0xff]
    %v142 = vld [vmem:[#allocation2 + $0x208] sm:$0xff]
    %v143 = vld [vmem:[#allocation2 + $0x210] sm:$0xff]
    %v144 = vld [vmem:[#allocation2 + $0x218] sm:$0xff]
    %v145 = vld [vmem:[#allocation2 + $0x220] sm:$0xff]
    %v146 = vld [vmem:[#allocation2 + $0x228] sm:$0xff]
    %v147 = vld [vmem:[#allocation2 + $0x230] sm:$0xff]
    %v148 = vld [vmem:[#allocation2 + $0x238] sm:$0xff]
    %v149 = vld [vmem:[#allocation2 + $0x240] sm:$0xff]
    %v150 = vld [vmem:[#allocation2 + $0x248] sm:$0xff]
    %v151 = vld [vmem:[#allocation2 + $0x250] sm:$0xff]
    %v152 = vld [vmem:[#allocation2 + $0x258] sm:$0xff]
    %v153 = vld [vmem:[#allocation2 + $0x260] sm:$0xff]
    %v154 = vld [vmem:[#allocation2 + $0x268] sm:$0xff]
    %v155 = vld [vmem:[#allocation2 + $0x270] sm:$0xff]
    %v156 = vld [vmem:[#allocation2 + $0x278] sm:$0xff]
    %v157 = vld [vmem:[#allocation2 + $0x280] sm:$0xff]
    %v158 = vld [vmem:[#allocation2 + $0x288] sm:$0xff]
    %v159 = vld [vmem:[#allocation2 + $0x290] sm:$0xff]
    %v160 = vld [vmem:[#allocation2 + $0x298] sm:$0xff]
    %v161 = vld [vmem:[#allocation2 + $0x2a0] sm:$0xff]
    %v162 = vld [vmem:[#allocation2 + $0x2a8] sm:$0xff]
    %v163 = vld [vmem:[#allocation2 + $0x2b0] sm:$0xff]
    %v164 = vld [vmem:[#allocation2 + $0x2b8] sm:$0xff]
    %v165 = vld [vmem:[#allocation2 + $0x2c0] sm:$0xff]
    %v166 = vld [vmem:[#allocation2 + $0x2c8] sm:$0xff]
    %v167 = vld [vmem:[#allocation2 + $0x2d0] sm:$0xff]
    %v168 = vld [vmem:[#allocation2 + $0x2d8] sm:$0xff]
    %v169 = vld [vmem:[#allocation2 + $0x2e0] sm:$0xff]
    %v170 = vld [vmem:[#allocation2 + $0x2e8] sm:$0xff]
    %v171 = vld [vmem:[#allocation2 + $0x2f0] sm:$0xff]
    %v172 = vld [vmem:[#allocation2 + $0x2f8] sm:$0xff]
    %v173 = vld [vmem:[#allocation2 + $0x300] sm:$0xff]
    %v174 = vld [vmem:[#allocation2 + $0x308] sm:$0xff]
    %v175 = vld [vmem:[#allocation2 + $0x310] sm:$0xff]
    %v176 = vld [vmem:[#allocation2 + $0x318] sm:$0xff]
    %v177 = vld [vmem:[#allocation2 + $0x320] sm:$0xff]
    %v178 = vld [vmem:[#allocation2 + $0x328] sm:$0xff]
    %v179 = vld [vmem:[#allocation2 + $0x330] sm:$0xff]
    %v180 = vld [vmem:[#allocation2 + $0x338] sm:$0xff]
    %v181 = vld [vmem:[#allocation2 + $0x340] sm:$0xff]
    %v182 = vld [vmem:[#allocation2 + $0x348] sm:$0xff]
    %v183 = vld [vmem:[#allocation2 + $0x350] sm:$0xff]
    %v184 = vld [vmem:[#allocation2 + $0x358] sm:$0xff]
    %v185 = vld [vmem:[#allocation2 + $0x360] sm:$0xff]
    %v186 = vld [vmem:[#allocation2 + $0x368] sm:$0xff]
    %v187 = vld [vmem:[#allocation2 + $0x370] sm:$0xff]
    %v188 = vld [vmem:[#allocation2 + $0x378] sm:$0xff]
    %v189 = vld [vmem:[#allocation2 + $0x380] sm:$0xff]
    %v190 = vld [vmem:[#allocation2 + $0x388] sm:$0xff]
    %v191 = vld [vmem:[#allocation2 + $0x390] sm:$0xff]
    %v192 = vld [vmem:[#allocation2 + $0x398] sm:$0xff]
    %v193 = vld [vmem:[#allocation2 + $0x3a0] sm:$0xff]
    %v194 = vld [vmem:[#allocation2 + $0x3a8] sm:$0xff]
    %v195 = vld [vmem:[#allocation2 + $0x3b0] sm:$0xff]
    %v196 = vld [vmem:[#allocation2 + $0x3b8] sm:$0xff]
    %v197 = vld [vmem:[#allocation2 + $0x3c0] sm:$0xff]
    %v198 = vld [vmem:[#allocation2 + $0x3c8] sm:$0xff]
    %v199 = vld [vmem:[#allocation2 + $0x3d0] sm:$0xff]
    %v200 = vld [vmem:[#allocation2 + $0x3d8] sm:$0xff]
    %v201 = vld [vmem:[#allocation2 + $0x3e0] sm:$0xff]
    %v202 = vld [vmem:[#allocation2 + $0x3e8] sm:$0xff]
    %v203 = vld [vmem:[#allocation2 + $0x3f0] sm:$0xff]
    %v204 = vld [vmem:[#allocation2 + $0x3f8] sm:$0xff]
    %v205 = vld [vmem:[#allocation2 + $0x400] sm:$0xff]
    %v206 = vld [vmem:[#allocation2 + $0x408] sm:$0xff]
    %v207 = vld [vmem:[#allocation2 + $0x410] sm:$0xff]
    %v208 = vld [vmem:[#allocation2 + $0x418] sm:$0xff]
    %v209 = vld [vmem:[#allocation2 + $0x420] sm:$0xff]
    %v210 = vld [vmem:[#allocation2 + $0x428] sm:$0xff]
    %v211 = vld [vmem:[#allocation2 + $0x430] sm:$0xff]
    %v212 = vld [vmem:[#allocation2 + $0x438] sm:$0xff]
    %v213 = vld [vmem:[#allocation2 + $0x440] sm:$0xff]
    %v214 = vld [vmem:[#allocation2 + $0x448] sm:$0xff]
    %v215 = vld [vmem:[#allocation2 + $0x450] sm:$0xff]
    %v216 = vld [vmem:[#allocation2 + $0x458] sm:$0xff]
    %v217 = vld [vmem:[#allocation2 + $0x460] sm:$0xff]
    %v218 = vld [vmem:[#allocation2 + $0x468] sm:$0xff]
    %v219 = vld [vmem:[#allocation2 + $0x470] sm:$0xff]
    %v220 = vld [vmem:[#allocation2 + $0x478] sm:$0xff]
    %v221 = vld [vmem:[#allocation2 + $0x480] sm:$0xff]
    %v222 = vld [vmem:[#allocation2 + $0x488] sm:$0xff]
    %v223 = vld [vmem:[#allocation2 + $0x490] sm:$0xff]
    %v224 = vld [vmem:[#allocation2 + $0x498] sm:$0xff]
    %v225 = vld [vmem:[#allocation2 + $0x4a0] sm:$0xff]
    %v226 = vld [vmem:[#allocation2 + $0x4a8] sm:$0xff]
    %v227 = vld [vmem:[#allocation2 + $0x4b0] sm:$0xff]
    %v228 = vld [vmem:[#allocation2 + $0x4b8] sm:$0xff]
    %v229 = vld [vmem:[#allocation2 + $0x4c0] sm:$0xff]
    %v230 = vld [vmem:[#allocation2 + $0x4c8] sm:$0xff]
    %v231 = vld [vmem:[#allocation2 + $0x4d0] sm:$0xff]
    %v232 = vld [vmem:[#allocation2 + $0x4d8] sm:$0xff]
    %v233 = vld [vmem:[#allocation2 + $0x4e0] sm:$0xff]
    %v234 = vld [vmem:[#allocation2 + $0x4e8] sm:$0xff]
    %v235 = vld [vmem:[#allocation2 + $0x4f0] sm:$0xff]
    %v236 = vld [vmem:[#allocation2 + $0x4f8] sm:$0xff]
    %v237 = vld [vmem:[#allocation2 + $0x500] sm:$0xff]
    %v238 = vld [vmem:[#allocation2 + $0x508] sm:$0xff]
    %v239 = vld [vmem:[#allocation2 + $0x510] sm:$0xff]
    %v240 = vld [vmem:[#allocation2 + $0x518] sm:$0xff]
    %v241 = vld [vmem:[#allocation2 + $0x520] sm:$0xff]
    %v242 = vld [vmem:[#allocation2 + $0x528] sm:$0xff]
    %v243 = vld [vmem:[#allocation2 + $0x530] sm:$0xff]
    %v244 = vld [vmem:[#allocation2 + $0x538] sm:$0xff]
    %v245 = vld [vmem:[#allocation2 + $0x540] sm:$0xff]
    %v246 = vld [vmem:[#allocation2 + $0x548] sm:$0xff]
    %v247 = vld [vmem:[#allocation2 + $0x550] sm:$0xff]
    %v248 = vld [vmem:[#allocation2 + $0x558] sm:$0xff]
    %v249 = vld [vmem:[#allocation2 + $0x560] sm:$0xff]
    %v250 = vld [vmem:[#allocation2 + $0x568] sm:$0xff]
    %v251 = vld [vmem:[#allocation2 + $0x570] sm:$0xff]
    %v252 = vld [vmem:[#allocation2 + $0x578] sm:$0xff]
    %v253 = vld [vmem:[#allocation2 + $0x580] sm:$0xff]
    %v254 = vld [vmem:[#allocation2 + $0x588] sm:$0xff]
    %v255 = vld [vmem:[#allocation2 + $0x590] sm:$0xff]
    %v256 = vld [vmem:[#allocation2 + $0x598] sm:$0xff]
    %v257 = vld [vmem:[#allocation2 + $0x5a0] sm:$0xff]
    %v258 = vld [vmem:[#allocation2 + $0x5a8] sm:$0xff]
    %v259 = vld [vmem:[#allocation2 + $0x5b0] sm:$0xff]
    %v260 = vld [vmem:[#allocation2 + $0x5b8] sm:$0xff]
    %v261 = vld [vmem:[#allocation2 + $0x5c0] sm:$0xff]
    %v262 = vld [vmem:[#allocation2 + $0x5c8] sm:$0xff]
    %v263 = vld [vmem:[#allocation2 + $0x5d0] sm:$0xff]
    %v264 = vld [vmem:[#allocation2 + $0x5d8] sm:$0xff]
    %v265 = vld [vmem:[#allocation2 + $0x5e0] sm:$0xff]
    %v266 = vld [vmem:[#allocation2 + $0x5e8] sm:$0xff]
    %v267 = vld [vmem:[#allocation2 + $0x5f0] sm:$0xff]
    %v268 = vld [vmem:[#allocation2 + $0x5f8] sm:$0xff]
    %v269 = vld [vmem:[#allocation2 + $0x600] sm:$0xff]
    %v270 = vld [vmem:[#allocation2 + $0x608] sm:$0xff]
    %v271 = vld [vmem:[#allocation2 + $0x610] sm:$0xff]
    %v272 = vld [vmem:[#allocation2 + $0x618] sm:$0xff]
    %v273 = vld [vmem:[%s2] sm:$0xf]
    %v275 = vlaneseq
    %v276 = vshrl.u32 %v275, 7
    %v277 = vsub.s32 0, %v276
    %v278 = vrot.slane %v273, %v277
    %v279 = vlaneseq
    %v280 = vshrl.u32 %v279, 7
    %v281 = vsub.s32 1, %v280
    %v282 = vrot.slane %v273, %v281
    %v283 = vlaneseq
    %v284 = vshrl.u32 %v283, 7
    %v285 = vsub.s32 2, %v284
    %v286 = vrot.slane %v273, %v285
    %v287 = vlaneseq
    %v288 = vshrl.u32 %v287, 7
    %v289 = vsub.s32 3, %v288
    %v290 = vrot.slane %v273, %v289
    %v491 = vunpack.c.l.b16 %v77
    %v492 = vunpack.c.h.b16 %v77
    %v493 = vunpack.c.l.b16 %v78
    %v494 = vunpack.c.h.b16 %v78
    %v495 = vunpack.c.l.b16 %v79
    %v496 = vunpack.c.h.b16 %v79
    %v497 = vunpack.c.l.b16 %v80
    %v498 = vunpack.c.h.b16 %v80
    %v499 = vunpack.c.l.b16 %v81
    %v500 = vunpack.c.h.b16 %v81
    %v501 = vunpack.c.l.b16 %v82
    %v502 = vunpack.c.h.b16 %v82
    %v503 = vunpack.c.l.b16 %v83
    %v504 = vunpack.c.h.b16 %v83
    %v505 = vunpack.c.l.b16 %v84
    %v506 = vunpack.c.h.b16 %v84
    %v507 = vunpack.c.l.b16 %v85
    %v508 = vunpack.c.h.b16 %v85
    %v509 = vunpack.c.l.b16 %v86
    %v510 = vunpack.c.h.b16 %v86
    %v511 = vunpack.c.l.b16 %v87
    %v512 = vunpack.c.h.b16 %v87
    %v513 = vunpack.c.l.b16 %v88
    %v514 = vunpack.c.h.b16 %v88
    %v515 = vunpack.c.l.b16 %v89
    %v516 = vunpack.c.h.b16 %v89
    %v517 = vunpack.c.l.b16 %v90
    %v518 = vunpack.c.h.b16 %v90
    %v519 = vunpack.c.l.b16 %v91
    %v520 = vunpack.c.h.b16 %v91
    %v521 = vunpack.c.l.b16 %v92
    %v522 = vunpack.c.h.b16 %v92
    %v523 = vunpack.c.l.b16 %v93
    %v524 = vunpack.c.h.b16 %v93
    %v525 = vunpack.c.l.b16 %v94
    %v526 = vunpack.c.h.b16 %v94
    %v527 = vunpack.c.l.b16 %v95
    %v528 = vunpack.c.h.b16 %v95
    %v529 = vunpack.c.l.b16 %v96
    %v530 = vunpack.c.h.b16 %v96
    %v531 = vunpack.c.l.b16 %v97
    %v532 = vunpack.c.h.b16 %v97
    %v533 = vunpack.c.l.b16 %v98
    %v534 = vunpack.c.h.b16 %v98
    %v535 = vunpack.c.l.b16 %v99
    %v536 = vunpack.c.h.b16 %v99
    %v537 = vunpack.c.l.b16 %v100
    %v538 = vunpack.c.h.b16 %v100
    %v539 = vunpack.c.l.b16 %v101
    %v540 = vunpack.c.h.b16 %v101
    %v541 = vunpack.c.l.b16 %v102
    %v542 = vunpack.c.h.b16 %v102
    %v543 = vunpack.c.l.b16 %v103
    %v544 = vunpack.c.h.b16 %v103
    %v545 = vunpack.c.l.b16 %v104
    %v546 = vunpack.c.h.b16 %v104
    %v547 = vunpack.c.l.b16 %v105
    %v548 = vunpack.c.h.b16 %v105
    %v549 = vunpack.c.l.b16 %v106
    %v550 = vunpack.c.h.b16 %v106
    %v551 = vunpack.c.l.b16 %v107
    %v552 = vunpack.c.h.b16 %v107
    %v553 = vunpack.c.l.b16 %v108
    %v554 = vunpack.c.h.b16 %v108
    %v555 = vunpack.c.l.b16 %v109
    %v556 = vunpack.c.h.b16 %v109
    %v557 = vunpack.c.l.b16 %v110
    %v558 = vunpack.c.h.b16 %v110
    %v559 = vunpack.c.l.b16 %v111
    %v560 = vunpack.c.h.b16 %v111
    %v561 = vunpack.c.l.b16 %v112
    %v562 = vunpack.c.h.b16 %v112
    %v563 = vunpack.c.l.b16 %v113
    %v564 = vunpack.c.h.b16 %v113
    %v565 = vunpack.c.l.b16 %v114
    %v566 = vunpack.c.h.b16 %v114
    %v567 = vunpack.c.l.b16 %v115
    %v568 = vunpack.c.h.b16 %v115
    %v569 = vunpack.c.l.b16 %v116
    %v570 = vunpack.c.h.b16 %v116
    %v571 = vunpack.c.l.b16 %v117
    %v572 = vunpack.c.h.b16 %v117
    %v573 = vunpack.c.l.b16 %v118
    %v574 = vunpack.c.h.b16 %v118
    %v575 = vunpack.c.l.b16 %v119
    %v576 = vunpack.c.h.b16 %v119
    %v577 = vunpack.c.l.b16 %v120
    %v578 = vunpack.c.h.b16 %v120
    %v579 = vunpack.c.l.b16 %v121
    %v580 = vunpack.c.h.b16 %v121
    %v581 = vunpack.c.l.b16 %v122
    %v582 = vunpack.c.h.b16 %v122
    %v583 = vunpack.c.l.b16 %v123
    %v584 = vunpack.c.h.b16 %v123
    %v585 = vunpack.c.l.b16 %v124
    %v586 = vunpack.c.h.b16 %v124
    %v587 = vunpack.c.l.b16 %v125
    %v588 = vunpack.c.h.b16 %v125
    %v589 = vunpack.c.l.b16 %v126
    %v590 = vunpack.c.h.b16 %v126
    %v591 = vunpack.c.l.b16 %v127
    %v592 = vunpack.c.h.b16 %v127
    %v593 = vunpack.c.l.b16 %v128
    %v594 = vunpack.c.h.b16 %v128
    %v595 = vunpack.c.l.b16 %v129
    %v596 = vunpack.c.h.b16 %v129
    %v597 = vunpack.c.l.b16 %v130
    %v598 = vunpack.c.h.b16 %v130
    %v599 = vunpack.c.l.b16 %v131
    %v600 = vunpack.c.h.b16 %v131
    %v601 = vunpack.c.l.b16 %v132
    %v602 = vunpack.c.h.b16 %v132
    %v603 = vunpack.c.l.b16 %v133
    %v604 = vunpack.c.h.b16 %v133
    %v605 = vunpack.c.l.b16 %v134
    %v606 = vunpack.c.h.b16 %v134
    %v607 = vunpack.c.l.b16 %v135
    %v608 = vunpack.c.h.b16 %v135
    %v609 = vunpack.c.l.b16 %v136
    %v610 = vunpack.c.h.b16 %v136
    %v611 = vunpack.c.l.b16 %v137
    %v612 = vunpack.c.h.b16 %v137
    %v613 = vunpack.c.l.b16 %v138
    %v614 = vunpack.c.h.b16 %v138
    %v615 = vunpack.c.l.b16 %v139
    %v616 = vunpack.c.h.b16 %v139
    %v617 = vunpack.c.l.b16 %v140
    %v618 = vunpack.c.h.b16 %v140
    %v619 = vunpack.c.l.b16 %v141
    %v620 = vunpack.c.h.b16 %v141
    %v621 = vunpack.c.l.b16 %v142
    %v622 = vunpack.c.h.b16 %v142
    %v623 = vunpack.c.l.b16 %v143
    %v624 = vunpack.c.h.b16 %v143
    %v625 = vunpack.c.l.b16 %v144
    %v626 = vunpack.c.h.b16 %v144
    %v627 = vunpack.c.l.b16 %v145
    %v628 = vunpack.c.h.b16 %v145
    %v629 = vunpack.c.l.b16 %v146
    %v630 = vunpack.c.h.b16 %v146
    %v631 = vunpack.c.l.b16 %v147
    %v632 = vunpack.c.h.b16 %v147
    %v633 = vunpack.c.l.b16 %v148
    %v634 = vunpack.c.h.b16 %v148
    %v635 = vunpack.c.l.b16 %v149
    %v636 = vunpack.c.h.b16 %v149
    %v637 = vunpack.c.l.b16 %v150
    %v638 = vunpack.c.h.b16 %v150
    %v639 = vunpack.c.l.b16 %v151
    %v640 = vunpack.c.h.b16 %v151
    %v641 = vunpack.c.l.b16 %v152
    %v642 = vunpack.c.h.b16 %v152
    %v643 = vunpack.c.l.b16 %v153
    %v644 = vunpack.c.h.b16 %v153
    %v645 = vunpack.c.l.b16 %v154
    %v646 = vunpack.c.h.b16 %v154
    %v647 = vunpack.c.l.b16 %v155
    %v648 = vunpack.c.h.b16 %v155
    %v649 = vunpack.c.l.b16 %v156
    %v650 = vunpack.c.h.b16 %v156
    %v651 = vunpack.c.l.b16 %v157
    %v652 = vunpack.c.h.b16 %v157
    %v653 = vunpack.c.l.b16 %v158
    %v654 = vunpack.c.h.b16 %v158
    %v655 = vunpack.c.l.b16 %v159
    %v656 = vunpack.c.h.b16 %v159
    %v657 = vunpack.c.l.b16 %v160
    %v658 = vunpack.c.h.b16 %v160
    %v659 = vunpack.c.l.b16 %v161
    %v660 = vunpack.c.h.b16 %v161
    %v661 = vunpack.c.l.b16 %v162
    %v662 = vunpack.c.h.b16 %v162
    %v663 = vunpack.c.l.b16 %v163
    %v664 = vunpack.c.h.b16 %v163
    %v665 = vunpack.c.l.b16 %v164
    %v666 = vunpack.c.h.b16 %v164
    %v667 = vunpack.c.l.b16 %v165
    %v668 = vunpack.c.h.b16 %v165
    %v669 = vunpack.c.l.b16 %v166
    %v670 = vunpack.c.h.b16 %v166
    %v671 = vunpack.c.l.b16 %v167
    %v672 = vunpack.c.h.b16 %v167
    %v673 = vunpack.c.l.b16 %v168
    %v674 = vunpack.c.h.b16 %v168
    %v675 = vunpack.c.l.b16 %v169
    %v676 = vunpack.c.h.b16 %v169
    %v677 = vunpack.c.l.b16 %v170
    %v678 = vunpack.c.h.b16 %v170
    %v679 = vunpack.c.l.b16 %v171
    %v680 = vunpack.c.h.b16 %v171
    %v681 = vunpack.c.l.b16 %v172
    %v682 = vunpack.c.h.b16 %v172
    %v683 = vunpack.c.l.b16 %v173
    %v684 = vunpack.c.h.b16 %v173
    %v685 = vunpack.c.l.b16 %v174
    %v686 = vunpack.c.h.b16 %v174
    %v687 = vunpack.c.l.b16 %v175
    %v688 = vunpack.c.h.b16 %v175
    %v689 = vunpack.c.l.b16 %v176
    %v690 = vunpack.c.h.b16 %v176
    %v691 = vunpack.c.l.b16 %v177
    %v692 = vunpack.c.h.b16 %v177
    %v693 = vunpack.c.l.b16 %v178
    %v694 = vunpack.c.h.b16 %v178
    %v695 = vunpack.c.l.b16 %v179
    %v696 = vunpack.c.h.b16 %v179
    %v697 = vunpack.c.l.b16 %v180
    %v698 = vunpack.c.h.b16 %v180
    %v699 = vunpack.c.l.b16 %v181
    %v700 = vunpack.c.h.b16 %v181
    %v701 = vunpack.c.l.b16 %v182
    %v702 = vunpack.c.h.b16 %v182
    %v703 = vunpack.c.l.b16 %v183
    %v704 = vunpack.c.h.b16 %v183
    %v705 = vunpack.c.l.b16 %v184
    %v706 = vunpack.c.h.b16 %v184
    %v707 = vunpack.c.l.b16 %v185
    %v708 = vunpack.c.h.b16 %v185
    %v709 = vunpack.c.l.b16 %v186
    %v710 = vunpack.c.h.b16 %v186
    %v711 = vunpack.c.l.b16 %v187
    %v712 = vunpack.c.h.b16 %v187
    %v713 = vunpack.c.l.b16 %v188
    %v714 = vunpack.c.h.b16 %v188
    %v715 = vunpack.c.l.b16 %v189
    %v716 = vunpack.c.h.b16 %v189
    %v717 = vunpack.c.l.b16 %v190
    %v718 = vunpack.c.h.b16 %v190
    %v719 = vunpack.c.l.b16 %v191
    %v720 = vunpack.c.h.b16 %v191
    %v721 = vunpack.c.l.b16 %v192
    %v722 = vunpack.c.h.b16 %v192
    %v723 = vunpack.c.l.b16 %v193
    %v724 = vunpack.c.h.b16 %v193
    %v725 = vunpack.c.l.b16 %v194
    %v726 = vunpack.c.h.b16 %v194
    %v727 = vunpack.c.l.b16 %v195
    %v728 = vunpack.c.h.b16 %v195
    %v729 = vunpack.c.l.b16 %v196
    %v730 = vunpack.c.h.b16 %v196
    %v731 = vunpack.c.l.b16 %v197
    %v732 = vunpack.c.h.b16 %v197
    %v733 = vunpack.c.l.b16 %v198
    %v734 = vunpack.c.h.b16 %v198
    %v735 = vunpack.c.l.b16 %v199
    %v736 = vunpack.c.h.b16 %v199
    %v737 = vunpack.c.l.b16 %v200
    %v738 = vunpack.c.h.b16 %v200
    %v739 = vunpack.c.l.b16 %v201
    %v740 = vunpack.c.h.b16 %v201
    %v741 = vunpack.c.l.b16 %v202
    %v742 = vunpack.c.h.b16 %v202
    %v743 = vunpack.c.l.b16 %v203
    %v744 = vunpack.c.h.b16 %v203
    %v745 = vunpack.c.l.b16 %v204
    %v746 = vunpack.c.h.b16 %v204
    %v747 = vunpack.c.l.b16 %v205
    %v748 = vunpack.c.h.b16 %v205
    %v749 = vunpack.c.l.b16 %v206
    %v750 = vunpack.c.h.b16 %v206
    %v751 = vunpack.c.l.b16 %v207
    %v752 = vunpack.c.h.b16 %v207
    %v753 = vunpack.c.l.b16 %v208
    %v754 = vunpack.c.h.b16 %v208
    %v755 = vunpack.c.l.b16 %v209
    %v756 = vunpack.c.h.b16 %v209
    %v757 = vunpack.c.l.b16 %v210
    %v758 = vunpack.c.h.b16 %v210
    %v759 = vunpack.c.l.b16 %v211
    %v760 = vunpack.c.h.b16 %v211
    %v761 = vunpack.c.l.b16 %v212
    %v762 = vunpack.c.h.b16 %v212
    %v763 = vunpack.c.l.b16 %v213
    %v764 = vunpack.c.h.b16 %v213
    %v765 = vunpack.c.l.b16 %v214
    %v766 = vunpack.c.h.b16 %v214
    %v767 = vunpack.c.l.b16 %v215
    %v768 = vunpack.c.h.b16 %v215
    %v769 = vunpack.c.l.b16 %v216
    %v770 = vunpack.c.h.b16 %v216
    %v771 = vunpack.c.l.b16 %v217
    %v772 = vunpack.c.h.b16 %v217
    %v773 = vunpack.c.l.b16 %v218
    %v774 = vunpack.c.h.b16 %v218
    %v775 = vunpack.c.l.b16 %v219
    %v776 = vunpack.c.h.b16 %v219
    %v777 = vunpack.c.l.b16 %v220
    %v778 = vunpack.c.h.b16 %v220
    %v779 = vunpack.c.l.b16 %v221
    %v780 = vunpack.c.h.b16 %v221
    %v781 = vunpack.c.l.b16 %v222
    %v782 = vunpack.c.h.b16 %v222
    %v783 = vunpack.c.l.b16 %v223
    %v784 = vunpack.c.h.b16 %v223
    %v785 = vunpack.c.l.b16 %v224
    %v786 = vunpack.c.h.b16 %v224
    %v787 = vunpack.c.l.b16 %v225
    %v788 = vunpack.c.h.b16 %v225
    %v789 = vunpack.c.l.b16 %v226
    %v790 = vunpack.c.h.b16 %v226
    %v791 = vunpack.c.l.b16 %v227
    %v792 = vunpack.c.h.b16 %v227
    %v793 = vunpack.c.l.b16 %v228
    %v794 = vunpack.c.h.b16 %v228
    %v795 = vunpack.c.l.b16 %v229
    %v796 = vunpack.c.h.b16 %v229
    %v797 = vunpack.c.l.b16 %v230
    %v798 = vunpack.c.h.b16 %v230
    %v799 = vunpack.c.l.b16 %v231
    %v800 = vunpack.c.h.b16 %v231
    %v801 = vunpack.c.l.b16 %v232
    %v802 = vunpack.c.h.b16 %v232
    %v803 = vunpack.c.l.b16 %v233
    %v804 = vunpack.c.h.b16 %v233
    %v805 = vunpack.c.l.b16 %v234
    %v806 = vunpack.c.h.b16 %v234
    %v807 = vunpack.c.l.b16 %v235
    %v808 = vunpack.c.h.b16 %v235
    %v809 = vunpack.c.l.b16 %v236
    %v810 = vunpack.c.h.b16 %v236
    %v811 = vunpack.c.l.b16 %v237
    %v812 = vunpack.c.h.b16 %v237
    %v813 = vunpack.c.l.b16 %v238
    %v814 = vunpack.c.h.b16 %v238
    %v815 = vunpack.c.l.b16 %v239
    %v816 = vunpack.c.h.b16 %v239
    %v817 = vunpack.c.l.b16 %v240
    %v818 = vunpack.c.h.b16 %v240
    %v819 = vunpack.c.l.b16 %v241
    %v820 = vunpack.c.h.b16 %v241
    %v821 = vunpack.c.l.b16 %v242
    %v822 = vunpack.c.h.b16 %v242
    %v823 = vunpack.c.l.b16 %v243
    %v824 = vunpack.c.h.b16 %v243
    %v825 = vunpack.c.l.b16 %v244
    %v826 = vunpack.c.h.b16 %v244
    %v827 = vunpack.c.l.b16 %v245
    %v828 = vunpack.c.h.b16 %v245
    %v829 = vunpack.c.l.b16 %v246
    %v830 = vunpack.c.h.b16 %v246
    %v831 = vunpack.c.l.b16 %v247
    %v832 = vunpack.c.h.b16 %v247
    %v833 = vunpack.c.l.b16 %v248
    %v834 = vunpack.c.h.b16 %v248
    %v835 = vunpack.c.l.b16 %v249
    %v836 = vunpack.c.h.b16 %v249
    %v837 = vunpack.c.l.b16 %v250
    %v838 = vunpack.c.h.b16 %v250
    %v839 = vunpack.c.l.b16 %v251
    %v840 = vunpack.c.h.b16 %v251
    %v841 = vunpack.c.l.b16 %v252
    %v842 = vunpack.c.h.b16 %v252
    %v843 = vunpack.c.l.b16 %v253
    %v844 = vunpack.c.h.b16 %v253
    %v845 = vunpack.c.l.b16 %v254
    %v846 = vunpack.c.h.b16 %v254
    %v847 = vunpack.c.l.b16 %v255
    %v848 = vunpack.c.h.b16 %v255
    %v849 = vunpack.c.l.b16 %v256
    %v850 = vunpack.c.h.b16 %v256
    %v851 = vunpack.c.l.b16 %v257
    %v852 = vunpack.c.h.b16 %v257
    %v853 = vunpack.c.l.b16 %v258
    %v854 = vunpack.c.h.b16 %v258
    %v855 = vunpack.c.l.b16 %v259
    %v856 = vunpack.c.h.b16 %v259
    %v857 = vunpack.c.l.b16 %v260
    %v858 = vunpack.c.h.b16 %v260
    %v859 = vunpack.c.l.b16 %v261
    %v860 = vunpack.c.h.b16 %v261
    %v861 = vunpack.c.l.b16 %v262
    %v862 = vunpack.c.h.b16 %v262
    %v863 = vunpack.c.l.b16 %v263
    %v864 = vunpack.c.h.b16 %v263
    %v865 = vunpack.c.l.b16 %v264
    %v866 = vunpack.c.h.b16 %v264
    %v867 = vunpack.c.l.b16 %v265
    %v868 = vunpack.c.h.b16 %v265
    %v869 = vunpack.c.l.b16 %v266
    %v870 = vunpack.c.h.b16 %v266
    %v871 = vunpack.c.l.b16 %v267
    %v872 = vunpack.c.h.b16 %v267
    %v873 = vunpack.c.l.b16 %v268
    %v874 = vunpack.c.h.b16 %v268
    %v875 = vunpack.c.l.b16 %v269
    %v876 = vunpack.c.h.b16 %v269
    %v877 = vunpack.c.l.b16 %v270
    %v878 = vunpack.c.h.b16 %v270
    %v879 = vunpack.c.l.b16 %v271
    %v880 = vunpack.c.h.b16 %v271
    %v881 = vunpack.c.l.b16 %v272
    %v882 = vunpack.c.h.b16 %v272
    %v883 = vpack.c.b16 %v495, %v491
    %v884 = vpack.c.b16 %v496, %v492
    %v885 = vpack.c.b16 %v497, %v493
    %v886 = vpack.c.b16 %v498, %v494
    %v887 = vpack.c.b16 %v503, %v499
    %v888 = vpack.c.b16 %v504, %v500
    %v889 = vpack.c.b16 %v505, %v501
    %v890 = vpack.c.b16 %v506, %v502
    %v891 = vpack.c.b16 %v511, %v507
    %v892 = vpack.c.b16 %v512, %v508
    %v893 = vpack.c.b16 %v513, %v509
    %v894 = vpack.c.b16 %v514, %v510
    %v895 = vpack.c.b16 %v519, %v515
    %v896 = vpack.c.b16 %v520, %v516
    %v897 = vpack.c.b16 %v521, %v517
    %v898 = vpack.c.b16 %v522, %v518
    %v899 = vpack.c.b16 %v527, %v523
    %v900 = vpack.c.b16 %v528, %v524
    %v901 = vpack.c.b16 %v529, %v525
    %v902 = vpack.c.b16 %v530, %v526
    %v903 = vpack.c.b16 %v535, %v531
    %v904 = vpack.c.b16 %v536, %v532
    %v905 = vpack.c.b16 %v537, %v533
    %v906 = vpack.c.b16 %v538, %v534
    %v907 = vpack.c.b16 %v543, %v539
    %v908 = vpack.c.b16 %v544, %v540
    %v909 = vpack.c.b16 %v545, %v541
    %v910 = vpack.c.b16 %v546, %v542
    %v911 = vpack.c.b16 %v551, %v547
    %v912 = vpack.c.b16 %v552, %v548
    %v913 = vpack.c.b16 %v553, %v549
    %v914 = vpack.c.b16 %v554, %v550
    %v915 = vpack.c.b16 %v559, %v555
    %v916 = vpack.c.b16 %v560, %v556
    %v917 = vpack.c.b16 %v561, %v557
    %v918 = vpack.c.b16 %v562, %v558
    %v919 = vpack.c.b16 %v567, %v563
    %v920 = vpack.c.b16 %v568, %v564
    %v921 = vpack.c.b16 %v569, %v565
    %v922 = vpack.c.b16 %v570, %v566
    %v923 = vpack.c.b16 %v575, %v571
    %v924 = vpack.c.b16 %v576, %v572
    %v925 = vpack.c.b16 %v577, %v573
    %v926 = vpack.c.b16 %v578, %v574
    %v927 = vpack.c.b16 %v583, %v579
    %v928 = vpack.c.b16 %v584, %v580
    %v929 = vpack.c.b16 %v585, %v581
    %v930 = vpack.c.b16 %v586, %v582
    %v931 = vpack.c.b16 %v591, %v587
    %v932 = vpack.c.b16 %v592, %v588
    %v933 = vpack.c.b16 %v593, %v589
    %v934 = vpack.c.b16 %v594, %v590
    %v935 = vpack.c.b16 %v599, %v595
    %v936 = vpack.c.b16 %v600, %v596
    %v937 = vpack.c.b16 %v601, %v597
    %v938 = vpack.c.b16 %v602, %v598
    %v939 = vpack.c.b16 %v607, %v603
    %v940 = vpack.c.b16 %v608, %v604
    %v941 = vpack.c.b16 %v609, %v605
    %v942 = vpack.c.b16 %v610, %v606
    %v943 = vpack.c.b16 %v615, %v611
    %v944 = vpack.c.b16 %v616, %v612
    %v945 = vpack.c.b16 %v617, %v613
    %v946 = vpack.c.b16 %v618, %v614
    %v947 = vpack.c.b16 %v623, %v619
    %v948 = vpack.c.b16 %v624, %v620
    %v949 = vpack.c.b16 %v625, %v621
    %v950 = vpack.c.b16 %v626, %v622
    %v951 = vpack.c.b16 %v631, %v627
    %v952 = vpack.c.b16 %v632, %v628
    %v953 = vpack.c.b16 %v633, %v629
    %v954 = vpack.c.b16 %v634, %v630
    %v955 = vpack.c.b16 %v639, %v635
    %v956 = vpack.c.b16 %v640, %v636
    %v957 = vpack.c.b16 %v641, %v637
    %v958 = vpack.c.b16 %v642, %v638
    %v959 = vpack.c.b16 %v647, %v643
    %v960 = vpack.c.b16 %v648, %v644
    %v961 = vpack.c.b16 %v649, %v645
    %v962 = vpack.c.b16 %v650, %v646
    %v963 = vpack.c.b16 %v655, %v651
    %v964 = vpack.c.b16 %v656, %v652
    %v965 = vpack.c.b16 %v657, %v653
    %v966 = vpack.c.b16 %v658, %v654
    %v967 = vpack.c.b16 %v663, %v659
    %v968 = vpack.c.b16 %v664, %v660
    %v969 = vpack.c.b16 %v665, %v661
    %v970 = vpack.c.b16 %v666, %v662
    %v971 = vpack.c.b16 %v671, %v667
    %v972 = vpack.c.b16 %v672, %v668
    %v973 = vpack.c.b16 %v673, %v669
    %v974 = vpack.c.b16 %v674, %v670
    %v975 = vpack.c.b16 %v679, %v675
    %v976 = vpack.c.b16 %v680, %v676
    %v977 = vpack.c.b16 %v681, %v677
    %v978 = vpack.c.b16 %v682, %v678
    %v979 = vpack.c.b16 %v687, %v683
    %v980 = vpack.c.b16 %v688, %v684
    %v981 = vpack.c.b16 %v689, %v685
    %v982 = vpack.c.b16 %v690, %v686
    %v983 = vpack.c.b16 %v695, %v691
    %v984 = vpack.c.b16 %v696, %v692
    %v985 = vpack.c.b16 %v697, %v693
    %v986 = vpack.c.b16 %v698, %v694
    %v987 = vpack.c.b16 %v703, %v699
    %v988 = vpack.c.b16 %v704, %v700
    %v989 = vpack.c.b16 %v705, %v701
    %v990 = vpack.c.b16 %v706, %v702
    %v991 = vpack.c.b16 %v711, %v707
    %v992 = vpack.c.b16 %v712, %v708
    %v993 = vpack.c.b16 %v713, %v709
    %v994 = vpack.c.b16 %v714, %v710
    %v995 = vpack.c.b16 %v719, %v715
    %v996 = vpack.c.b16 %v720, %v716
    %v997 = vpack.c.b16 %v721, %v717
    %v998 = vpack.c.b16 %v722, %v718
    %v999 = vpack.c.b16 %v727, %v723
    %v1000 = vpack.c.b16 %v728, %v724
    %v1001 = vpack.c.b16 %v729, %v725
    %v1002 = vpack.c.b16 %v730, %v726
    %v1003 = vpack.c.b16 %v735, %v731
    %v1004 = vpack.c.b16 %v736, %v732
    %v1005 = vpack.c.b16 %v737, %v733
    %v1006 = vpack.c.b16 %v738, %v734
    %v1007 = vpack.c.b16 %v743, %v739
    %v1008 = vpack.c.b16 %v744, %v740
    %v1009 = vpack.c.b16 %v745, %v741
    %v1010 = vpack.c.b16 %v746, %v742
    %v1011 = vpack.c.b16 %v751, %v747
    %v1012 = vpack.c.b16 %v752, %v748
    %v1013 = vpack.c.b16 %v753, %v749
    %v1014 = vpack.c.b16 %v754, %v750
    %v1015 = vpack.c.b16 %v759, %v755
    %v1016 = vpack.c.b16 %v760, %v756
    %v1017 = vpack.c.b16 %v761, %v757
    %v1018 = vpack.c.b16 %v762, %v758
    %v1019 = vpack.c.b16 %v767, %v763
    %v1020 = vpack.c.b16 %v768, %v764
    %v1021 = vpack.c.b16 %v769, %v765
    %v1022 = vpack.c.b16 %v770, %v766
    %v1023 = vpack.c.b16 %v775, %v771
    %v1024 = vpack.c.b16 %v776, %v772
    %v1025 = vpack.c.b16 %v777, %v773
    %v1026 = vpack.c.b16 %v778, %v774
    %v1027 = vpack.c.b16 %v783, %v779
    %v1028 = vpack.c.b16 %v784, %v780
    %v1029 = vpack.c.b16 %v785, %v781
    %v1030 = vpack.c.b16 %v786, %v782
    %v1031 = vpack.c.b16 %v791, %v787
    %v1032 = vpack.c.b16 %v792, %v788
    %v1033 = vpack.c.b16 %v793, %v789
    %v1034 = vpack.c.b16 %v794, %v790
    %v1035 = vpack.c.b16 %v799, %v795
    %v1036 = vpack.c.b16 %v800, %v796
    %v1037 = vpack.c.b16 %v801, %v797
    %v1038 = vpack.c.b16 %v802, %v798
    %v1039 = vpack.c.b16 %v807, %v803
    %v1040 = vpack.c.b16 %v808, %v804
    %v1041 = vpack.c.b16 %v809, %v805
    %v1042 = vpack.c.b16 %v810, %v806
    %v1043 = vpack.c.b16 %v815, %v811
    %v1044 = vpack.c.b16 %v816, %v812
    %v1045 = vpack.c.b16 %v817, %v813
    %v1046 = vpack.c.b16 %v818, %v814
    %v1047 = vpack.c.b16 %v823, %v819
    %v1048 = vpack.c.b16 %v824, %v820
    %v1049 = vpack.c.b16 %v825, %v821
    %v1050 = vpack.c.b16 %v826, %v822
    %v1051 = vpack.c.b16 %v831, %v827
    %v1052 = vpack.c.b16 %v832, %v828
    %v1053 = vpack.c.b16 %v833, %v829
    %v1054 = vpack.c.b16 %v834, %v830
    %v1055 = vpack.c.b16 %v839, %v835
    %v1056 = vpack.c.b16 %v840, %v836
    %v1057 = vpack.c.b16 %v841, %v837
    %v1058 = vpack.c.b16 %v842, %v838
    %v1059 = vpack.c.b16 %v847, %v843
    %v1060 = vpack.c.b16 %v848, %v844
    %v1061 = vpack.c.b16 %v849, %v845
    %v1062 = vpack.c.b16 %v850, %v846
    %v1063 = vpack.c.b16 %v855, %v851
    %v1064 = vpack.c.b16 %v856, %v852
    %v1065 = vpack.c.b16 %v857, %v853
    %v1066 = vpack.c.b16 %v858, %v854
    %v1067 = vpack.c.b16 %v863, %v859
    %v1068 = vpack.c.b16 %v864, %v860
    %v1069 = vpack.c.b16 %v865, %v861
    %v1070 = vpack.c.b16 %v866, %v862
    %v1071 = vpack.c.b16 %v871, %v867
    %v1072 = vpack.c.b16 %v872, %v868
    %v1073 = vpack.c.b16 %v873, %v869
    %v1074 = vpack.c.b16 %v874, %v870
    %v1075 = vpack.c.b16 %v879, %v875
    %v1076 = vpack.c.b16 %v880, %v876
    %v1077 = vpack.c.b16 %v881, %v877
    %v1078 = vpack.c.b16 %v882, %v878
    %vm1275 = vcmask 130048
    %v1277 = vsel %vm1275, %v76, 0
    %1279 = vmatprep.subr.bf16.mxu0 %v884
    %1280 = vmatpush1.bf16.msra.mxu0 %v883
    %1281 = vmatprep.subr.bf16.mxu0 %v888
    %1282 = vmatpush1.bf16.msra.mxu0 %v887
    %1283 = vmatprep.subr.bf16.mxu0 %v892
    %1284 = vmatpush1.bf16.msra.mxu0 %v891
    %1285 = vmatprep.subr.bf16.mxu0 %v896
    %1286 = vmatpush1.bf16.msra.mxu0 %v895
    %1287 = vmatprep.subr.bf16.mxu0 %v900
    %1288 = vmatpush1.bf16.msra.mxu0 %v899
    %1289 = vmatprep.subr.bf16.mxu0 %v904
    %1290 = vmatpush1.bf16.msra.mxu0 %v903
    %1291 = vmatprep.subr.bf16.mxu0 %v908
    %1292 = vmatpush1.bf16.msra.mxu0 %v907
    %1293 = vmatprep.subr.bf16.mxu0 %v912
    %1294 = vmatpush1.bf16.msra.mxu0 %v911
    %1295 = vmatprep.subr.bf16.mxu0 %v916
    %1296 = vmatpush1.bf16.msra.mxu0 %v915
    %1297 = vmatprep.subr.bf16.mxu0 %v920
    %1298 = vmatpush1.bf16.msra.mxu0 %v919
    %1299 = vmatprep.subr.bf16.mxu0 %v924
    %1300 = vmatpush1.bf16.msra.mxu0 %v923
    %1301 = vmatprep.subr.bf16.mxu0 %v928
    %1302 = vmatpush1.bf16.msra.mxu0 %v927
    %1303 = vmatprep.subr.bf16.mxu0 %v932
    %1304 = vmatpush1.bf16.msra.mxu0 %v931
    %1305 = vmatprep.subr.bf16.mxu0 %v936
    %1306 = vmatpush1.bf16.msra.mxu0 %v935
    %1307 = vmatprep.subr.bf16.mxu0 %v940
    %1308 = vmatpush1.bf16.msra.mxu0 %v939
    %1309 = vmatprep.subr.bf16.mxu0 %v944
    %1310 = vmatpush1.bf16.msra.mxu0 %v943
    %1311 = vmatprep.mubr.bf16.mxu0 %v71
    %1312 = vmatmul.mubr.bf16.gmra.mrb[0].mxu0 %v70
    %v1313 = vpop.f32.mrb[0].mxu0
    %v1314 = vadd.f32 %v278, %v1313
    %v1315 = vpop.f32.mrb[0].mxu0
    %v1316 = vadd.f32 %v282, %v1315
    %v1317 = vpop.f32.mrb[0].mxu0
    %v1318 = vadd.f32 %v278, %v1317
    %v1319 = vpop.f32.mrb[0].mxu0
    %v1320 = vadd.f32 %v282, %v1319
    %1321 = vdwg.mxu0
    %1322 = vmatprep.subr.bf16.mxu0 %v948
    %1323 = vmatpush1.bf16.msra.mxu0 %v947
    %1324 = vmatprep.subr.bf16.mxu0 %v952
    %1325 = vmatpush1.bf16.msra.mxu0 %v951
    %1326 = vmatprep.subr.bf16.mxu0 %v956
    %1327 = vmatpush1.bf16.msra.mxu0 %v955
    %1328 = vmatprep.subr.bf16.mxu0 %v960
    %1329 = vmatpush1.bf16.msra.mxu0 %v959
    %1330 = vmatprep.subr.bf16.mxu0 %v964
    %1331 = vmatpush1.bf16.msra.mxu0 %v963
    %1332 = vmatprep.subr.bf16.mxu0 %v968
    %1333 = vmatpush1.bf16.msra.mxu0 %v967
    %1334 = vmatprep.subr.bf16.mxu0 %v972
    %1335 = vmatpush1.bf16.msra.mxu0 %v971
    %1336 = vmatprep.subr.bf16.mxu0 %v976
    %1337 = vmatpush1.bf16.msra.mxu0 %v975
    %1338 = vmatprep.subr.bf16.mxu0 %v980
    %1339 = vmatpush1.bf16.msra.mxu0 %v979
    %1340 = vmatprep.subr.bf16.mxu0 %v984
    %1341 = vmatpush1.bf16.msra.mxu0 %v983
    %1342 = vmatprep.subr.bf16.mxu0 %v988
    %1343 = vmatpush1.bf16.msra.mxu0 %v987
    %1344 = vmatprep.subr.bf16.mxu0 %v992
    %1345 = vmatpush1.bf16.msra.mxu0 %v991
    %1346 = vmatprep.subr.bf16.mxu0 %v996
    %1347 = vmatpush1.bf16.msra.mxu0 %v995
    %1348 = vmatprep.subr.bf16.mxu0 %v1000
    %1349 = vmatpush1.bf16.msra.mxu0 %v999
    %1350 = vmatprep.subr.bf16.mxu0 %v1004
    %1351 = vmatpush1.bf16.msra.mxu0 %v1003
    %1352 = vmatprep.subr.bf16.mxu0 %v1008
    %1353 = vmatpush1.bf16.msra.mxu0 %v1007
    %1354 = vmatprep.mubr.bf16.mxu0 %v73
    %1355 = vmatmul.mubr.bf16.gmra.mrb[0].mxu0 %v72
    %v1356 = vpop.f32.mrb[0].mxu0
    %v1357 = vadd.f32 %v1314, %v1356
    %v1358 = vpop.f32.mrb[0].mxu0
    %v1359 = vadd.f32 %v1316, %v1358
    %v1360 = vpop.f32.mrb[0].mxu0
    %v1361 = vadd.f32 %v1318, %v1360
    %v1362 = vpop.f32.mrb[0].mxu0
    %v1363 = vadd.f32 %v1320, %v1362
    %1364 = vdwg.mxu0
    %1365 = vmatprep.subr.bf16.mxu0 %v1012
    %1366 = vmatpush1.bf16.msra.mxu0 %v1011
    %1367 = vmatprep.subr.bf16.mxu0 %v1016
    %1368 = vmatpush1.bf16.msra.mxu0 %v1015
    %1369 = vmatprep.subr.bf16.mxu0 %v1020
    %1370 = vmatpush1.bf16.msra.mxu0 %v1019
    %1371 = vmatprep.subr.bf16.mxu0 %v1024
    %1372 = vmatpush1.bf16.msra.mxu0 %v1023
    %1373 = vmatprep.subr.bf16.mxu0 %v1028
    %1374 = vmatpush1.bf16.msra.mxu0 %v1027
    %1375 = vmatprep.subr.bf16.mxu0 %v1032
    %1376 = vmatpush1.bf16.msra.mxu0 %v1031
    %1377 = vmatprep.subr.bf16.mxu0 %v1036
    %1378 = vmatpush1.bf16.msra.mxu0 %v1035
    %1379 = vmatprep.subr.bf16.mxu0 %v1040
    %1380 = vmatpush1.bf16.msra.mxu0 %v1039
    %1381 = vmatprep.subr.bf16.mxu0 %v1044
    %1382 = vmatpush1.bf16.msra.mxu0 %v1043
    %1383 = vmatprep.subr.bf16.mxu0 %v1048
    %1384 = vmatpush1.bf16.msra.mxu0 %v1047
    %1385 = vmatprep.subr.bf16.mxu0 %v1052
    %1386 = vmatpush1.bf16.msra.mxu0 %v1051
    %1387 = vmatprep.subr.bf16.mxu0 %v1056
    %1388 = vmatpush1.bf16.msra.mxu0 %v1055
    %1389 = vmatprep.subr.bf16.mxu0 %v1060
    %1390 = vmatpush1.bf16.msra.mxu0 %v1059
    %1391 = vmatprep.subr.bf16.mxu0 %v1064
    %1392 = vmatpush1.bf16.msra.mxu0 %v1063
    %1393 = vmatprep.subr.bf16.mxu0 %v1068
    %1394 = vmatpush1.bf16.msra.mxu0 %v1067
    %1395 = vmatprep.subr.bf16.mxu0 %v1072
    %1396 = vmatpush1.bf16.msra.mxu0 %v1071
    %1397 = vmatprep.mubr.bf16.mxu0 %v75
    %1398 = vmatmul.mubr.bf16.gmra.mrb[0].mxu0 %v74
    %v1399 = vpop.f32.mrb[0].mxu0
    %v1400 = vadd.f32 %v1357, %v1399
    %v1401 = vpop.f32.mrb[0].mxu0
    %v1402 = vadd.f32 %v1359, %v1401
    %v1403 = vpop.f32.mrb[0].mxu0
    %v1404 = vadd.f32 %v1361, %v1403
    %v1405 = vpop.f32.mrb[0].mxu0
    %v1406 = vadd.f32 %v1363, %v1405
    %1407 = vdwg.mxu0
    %1408 = vmatprep.subr.bf16.mxu0 %v1076
    %1409 = vmatpush1.bf16.msra.mxu0 %v1075
    %1410 = vmatprep.subr.bf16.mxu0 0
    %1411 = vmatpush1.bf16.msra.mxu0 0
    %1412 = vmatprep.subr.bf16.mxu0 0
    %1413 = vmatpush1.bf16.msra.mxu0 0
    %1414 = vmatprep.subr.bf16.mxu0 0
    %1415 = vmatpush1.bf16.msra.mxu0 0
    %1416 = vmatprep.subr.bf16.mxu0 0
    %1417 = vmatpush1.bf16.msra.mxu0 0
    %1418 = vmatprep.subr.bf16.mxu0 0
    %1419 = vmatpush1.bf16.msra.mxu0 0
    %1420 = vmatprep.subr.bf16.mxu0 0
    %1421 = vmatpush1.bf16.msra.mxu0 0
    %1422 = vmatprep.subr.bf16.mxu0 0
    %1423 = vmatpush1.bf16.msra.mxu0 0
    %1424 = vmatprep.subr.bf16.mxu0 0
    %1425 = vmatpush1.bf16.msra.mxu0 0
    %1426 = vmatprep.subr.bf16.mxu0 0
    %1427 = vmatpush1.bf16.msra.mxu0 0
    %1428 = vmatprep.subr.bf16.mxu0 0
    %1429 = vmatpush1.bf16.msra.mxu0 0
    %1430 = vmatprep.subr.bf16.mxu0 0
    %1431 = vmatpush1.bf16.msra.mxu0 0
    %1432 = vmatprep.subr.bf16.mxu0 0
    %1433 = vmatpush1.bf16.msra.mxu0 0
    %1434 = vmatprep.subr.bf16.mxu0 0
    %1435 = vmatpush1.bf16.msra.mxu0 0
    %1436 = vmatprep.subr.bf16.mxu0 0
    %1437 = vmatpush1.bf16.msra.mxu0 0
    %1438 = vmatprep.subr.bf16.mxu0 0
    %1439 = vmatpush1.bf16.msra.mxu0 0
    %1440 = vmatprep.mubr.bf16.mxu0 0
    %1441 = vmatmul.mubr.bf16.gmra.mrb[0].mxu0 %v1277
    %v1442 = vpop.f32.mrb[0].mxu0
    %v1443 = vadd.f32 %v1400, %v1442
    %v1444 = vpop.f32.mrb[0].mxu0
    %v1445 = vadd.f32 %v1402, %v1444
    %v1446 = vpop.f32.mrb[0].mxu0
    %v1447 = vadd.f32 %v1404, %v1446
    %v1448 = vpop.f32.mrb[0].mxu0
    %v1449 = vadd.f32 %v1406, %v1448
    %1450 = vdwg.mxu0
    %1451 = vmatprep.subr.bf16.mxu0 %v886
    %1452 = vmatpush1.bf16.msra.mxu0 %v885
    %1453 = vmatprep.subr.bf16.mxu0 %v890
    %1454 = vmatpush1.bf16.msra.mxu0 %v889
    %1455 = vmatprep.subr.bf16.mxu0 %v894
    %1456 = vmatpush1.bf16.msra.mxu0 %v893
    %1457 = vmatprep.subr.bf16.mxu0 %v898
    %1458 = vmatpush1.bf16.msra.mxu0 %v897
    %1459 = vmatprep.subr.bf16.mxu0 %v902
    %1460 = vmatpush1.bf16.msra.mxu0 %v901
    %1461 = vmatprep.subr.bf16.mxu0 %v906
    %1462 = vmatpush1.bf16.msra.mxu0 %v905
    %1463 = vmatprep.subr.bf16.mxu0 %v910
    %1464 = vmatpush1.bf16.msra.mxu0 %v909
    %1465 = vmatprep.subr.bf16.mxu0 %v914
    %1466 = vmatpush1.bf16.msra.mxu0 %v913
    %1467 = vmatprep.subr.bf16.mxu0 %v918
    %1468 = vmatpush1.bf16.msra.mxu0 %v917
    %1469 = vmatprep.subr.bf16.mxu0 %v922
    %1470 = vmatpush1.bf16.msra.mxu0 %v921
    %1471 = vmatprep.subr.bf16.mxu0 %v926
    %1472 = vmatpush1.bf16.msra.mxu0 %v925
    %1473 = vmatprep.subr.bf16.mxu0 %v930
    %1474 = vmatpush1.bf16.msra.mxu0 %v929
    %1475 = vmatprep.subr.bf16.mxu0 %v934
    %1476 = vmatpush1.bf16.msra.mxu0 %v933
    %1477 = vmatprep.subr.bf16.mxu0 %v938
    %1478 = vmatpush1.bf16.msra.mxu0 %v937
    %1479 = vmatprep.subr.bf16.mxu0 %v942
    %1480 = vmatpush1.bf16.msra.mxu0 %v941
    %1481 = vmatprep.subr.bf16.mxu0 %v946
    %1482 = vmatpush1.bf16.msra.mxu0 %v945
    %1483 = vmatprep.mubr.bf16.mxu0 %v71
    %1484 = vmatmul.mubr.bf16.gmra.mrb[0].mxu0 %v70
    %v1485 = vpop.f32.mrb[0].mxu0
    %v1486 = vadd.f32 %v286, %v1485
    %v1487 = vpop.f32.mrb[0].mxu0
    %v1488 = vadd.f32 %v290, %v1487
    %v1489 = vpop.f32.mrb[0].mxu0
    %v1490 = vadd.f32 %v286, %v1489
    %v1491 = vpop.f32.mrb[0].mxu0
    %v1492 = vadd.f32 %v290, %v1491
    %1493 = vdwg.mxu0
    %1494 = vmatprep.subr.bf16.mxu0 %v950
    %1495 = vmatpush1.bf16.msra.mxu0 %v949
    %1496 = vmatprep.subr.bf16.mxu0 %v954
    %1497 = vmatpush1.bf16.msra.mxu0 %v953
    %1498 = vmatprep.subr.bf16.mxu0 %v958
    %1499 = vmatpush1.bf16.msra.mxu0 %v957
    %1500 = vmatprep.subr.bf16.mxu0 %v962
    %1501 = vmatpush1.bf16.msra.mxu0 %v961
    %1502 = vmatprep.subr.bf16.mxu0 %v966
    %1503 = vmatpush1.bf16.msra.mxu0 %v965
    %1504 = vmatprep.subr.bf16.mxu0 %v970
    %1505 = vmatpush1.bf16.msra.mxu0 %v969
    %1506 = vmatprep.subr.bf16.mxu0 %v974
    %1507 = vmatpush1.bf16.msra.mxu0 %v973
    %1508 = vmatprep.subr.bf16.mxu0 %v978
    %1509 = vmatpush1.bf16.msra.mxu0 %v977
    %1510 = vmatprep.subr.bf16.mxu0 %v982
    %1511 = vmatpush1.bf16.msra.mxu0 %v981
    %1512 = vmatprep.subr.bf16.mxu0 %v986
    %1513 = vmatpush1.bf16.msra.mxu0 %v985
    %1514 = vmatprep.subr.bf16.mxu0 %v990
    %1515 = vmatpush1.bf16.msra.mxu0 %v989
    %1516 = vmatprep.subr.bf16.mxu0 %v994
    %1517 = vmatpush1.bf16.msra.mxu0 %v993
    %1518 = vmatprep.subr.bf16.mxu0 %v998
    %1519 = vmatpush1.bf16.msra.mxu0 %v997
    %1520 = vmatprep.subr.bf16.mxu0 %v1002
    %1521 = vmatpush1.bf16.msra.mxu0 %v1001
    %1522 = vmatprep.subr.bf16.mxu0 %v1006
    %1523 = vmatpush1.bf16.msra.mxu0 %v1005
    %1524 = vmatprep.subr.bf16.mxu0 %v1010
    %1525 = vmatpush1.bf16.msra.mxu0 %v1009
    %1526 = vmatprep.mubr.bf16.mxu0 %v73
    %1527 = vmatmul.mubr.bf16.gmra.mrb[0].mxu0 %v72
    %v1528 = vpop.f32.mrb[0].mxu0
    %v1529 = vadd.f32 %v1486, %v1528
    %v1530 = vpop.f32.mrb[0].mxu0
    %v1531 = vadd.f32 %v1488, %v1530
    %v1532 = vpop.f32.mrb[0].mxu0
    %v1533 = vadd.f32 %v1490, %v1532
    %v1534 = vpop.f32.mrb[0].mxu0
    %v1535 = vadd.f32 %v1492, %v1534
    %1536 = vdwg.mxu0
    %1537 = vmatprep.subr.bf16.mxu0 %v1014
    %1538 = vmatpush1.bf16.msra.mxu0 %v1013
    %1539 = vmatprep.subr.bf16.mxu0 %v1018
    %1540 = vmatpush1.bf16.msra.mxu0 %v1017
    %1541 = vmatprep.subr.bf16.mxu0 %v1022
    %1542 = vmatpush1.bf16.msra.mxu0 %v1021
    %1543 = vmatprep.subr.bf16.mxu0 %v1026
    %1544 = vmatpush1.bf16.msra.mxu0 %v1025
    %1545 = vmatprep.subr.bf16.mxu0 %v1030
    %1546 = vmatpush1.bf16.msra.mxu0 %v1029
    %1547 = vmatprep.subr.bf16.mxu0 %v1034
    %1548 = vmatpush1.bf16.msra.mxu0 %v1033
    %1549 = vmatprep.subr.bf16.mxu0 %v1038
    %1550 = vmatpush1.bf16.msra.mxu0 %v1037
    %1551 = vmatprep.subr.bf16.mxu0 %v1042
    %1552 = vmatpush1.bf16.msra.mxu0 %v1041
    %1553 = vmatprep.subr.bf16.mxu0 %v1046
    %1554 = vmatpush1.bf16.msra.mxu0 %v1045
    %1555 = vmatprep.subr.bf16.mxu0 %v1050
    %1556 = vmatpush1.bf16.msra.mxu0 %v1049
    %1557 = vmatprep.subr.bf16.mxu0 %v1054
    %1558 = vmatpush1.bf16.msra.mxu0 %v1053
    %1559 = vmatprep.subr.bf16.mxu0 %v1058
    %1560 = vmatpush1.bf16.msra.mxu0 %v1057
    %1561 = vmatprep.subr.bf16.mxu0 %v1062
    %1562 = vmatpush1.bf16.msra.mxu0 %v1061
    %1563 = vmatprep.subr.bf16.mxu0 %v1066
    %1564 = vmatpush1.bf16.msra.mxu0 %v1065
    %1565 = vmatprep.subr.bf16.mxu0 %v1070
    %1566 = vmatpush1.bf16.msra.mxu0 %v1069
    %1567 = vmatprep.subr.bf16.mxu0 %v1074
    %1568 = vmatpush1.bf16.msra.mxu0 %v1073
    %1569 = vmatprep.mubr.bf16.mxu0 %v75
    %1570 = vmatmul.mubr.bf16.gmra.mrb[0].mxu0 %v74
    %v1571 = vpop.f32.mrb[0].mxu0
    %v1572 = vadd.f32 %v1529, %v1571
    %v1573 = vpop.f32.mrb[0].mxu0
    %v1574 = vadd.f32 %v1531, %v1573
    %v1575 = vpop.f32.mrb[0].mxu0
    %v1576 = vadd.f32 %v1533, %v1575
    %v1577 = vpop.f32.mrb[0].mxu0
    %v1578 = vadd.f32 %v1535, %v1577
    %1579 = vdwg.mxu0
    %1580 = vmatprep.subr.bf16.mxu0 %v1078
    %1581 = vmatpush1.bf16.msra.mxu0 %v1077
    %1582 = vmatprep.subr.bf16.mxu0 0
    %1583 = vmatpush1.bf16.msra.mxu0 0
    %1584 = vmatprep.subr.bf16.mxu0 0
    %1585 = vmatpush1.bf16.msra.mxu0 0
    %1586 = vmatprep.subr.bf16.mxu0 0
    %1587 = vmatpush1.bf16.msra.mxu0 0
    %1588 = vmatprep.subr.bf16.mxu0 0
    %1589 = vmatpush1.bf16.msra.mxu0 0
    %1590 = vmatprep.subr.bf16.mxu0 0
    %1591 = vmatpush1.bf16.msra.mxu0 0
    %1592 = vmatprep.subr.bf16.mxu0 0
    %1593 = vmatpush1.bf16.msra.mxu0 0
    %1594 = vmatprep.subr.bf16.mxu0 0
    %1595 = vmatpush1.bf16.msra.mxu0 0
    %1596 = vmatprep.subr.bf16.mxu0 0
    %1597 = vmatpush1.bf16.msra.mxu0 0
    %1598 = vmatprep.subr.bf16.mxu0 0
    %1599 = vmatpush1.bf16.msra.mxu0 0
    %1600 = vmatprep.subr.bf16.mxu0 0
    %1601 = vmatpush1.bf16.msra.mxu0 0
    %1602 = vmatprep.subr.bf16.mxu0 0
    %1603 = vmatpush1.bf16.msra.mxu0 0
    %1604 = vmatprep.subr.bf16.mxu0 0
    %1605 = vmatpush1.bf16.msra.mxu0 0
    %1606 = vmatprep.subr.bf16.mxu0 0
    %1607 = vmatpush1.bf16.msra.mxu0 0
    %1608 = vmatprep.subr.bf16.mxu0 0
    %1609 = vmatpush1.bf16.msra.mxu0 0
    %1610 = vmatprep.subr.bf16.mxu0 0
    %1611 = vmatpush1.bf16.msra.mxu0 0
    %1612 = vmatprep.mubr.bf16.mxu0 0
    %1613 = vmatmul.mubr.bf16.gmra.mrb[0].mxu0 %v1277
    %v1614 = vpop.f32.mrb[0].mxu0
    %v1615 = vadd.f32 %v1572, %v1614
    %v1616 = vpop.f32.mrb[0].mxu0
    %v1617 = vadd.f32 %v1574, %v1616
    %v1618 = vpop.f32.mrb[0].mxu0
    %v1619 = vadd.f32 %v1576, %v1618
    %v1620 = vpop.f32.mrb[0].mxu0
    %v1621 = vadd.f32 %v1578, %v1620
    %1622 = vdwg.mxu0
    %v1623 = vpack.c.bf16 %v1447, %v1443
    %v1624 = vpack.c.bf16 %v1449, %v1445
    %v1625 = vpack.c.bf16 %v1619, %v1615
    %v1626 = vpack.c.bf16 %v1621, %v1617
    %v1627 = vmul.bf16 %v1623, 1056980736
    %v1628 = vmul.bf16 %v1624, 1056980736
    %v1629 = vmul.bf16 %v1625, 1056980736
    %v1630 = vmul.bf16 %v1626, 1056980736
    %v1631 = vtanh.bf16.pop %v1627
    %v1632 = vtanh.bf16.pop %v1628
    %v1633 = vtanh.bf16.pop %v1629
    %v1634 = vtanh.bf16.pop %v1630
    %v1635 = vmul.bf16 %v1631, 1056980736
    %v1636 = vmul.bf16 %v1632, 1056980736
    %v1637 = vmul.bf16 %v1633, 1056980736
    %v1638 = vmul.bf16 %v1634, 1056980736
    %v1639 = vadd.bf16 %v1635, 1056980736
    %v1640 = vadd.bf16 %v1636, 1056980736
    %v1641 = vadd.bf16 %v1637, 1056980736
    %v1642 = vadd.bf16 %v1638, 1056980736
    %v1643 = vld [vmem:[#allocation4] sm:$0xff]
    %v1644 = vld [vmem:[#allocation4 + $0x8] sm:$0xff]
    %v1645 = vld [vmem:[#allocation4 + $0x10] sm:$0xff]
    %v1646 = vld [vmem:[#allocation4 + $0x18] sm:$0xff]
    %v1647 = vld [vmem:[#allocation4 + $0x20] sm:$0xff]
    %v1648 = vld [vmem:[#allocation4 + $0x28] sm:$0xff]
    %v1649 = vld [vmem:[#allocation4 + $0x30] sm:$0xff]
    %v1650 = vld [vmem:[#allocation4 + $0x38] sm:$0xff]
    %v1651 = vld [vmem:[#allocation4 + $0x40] sm:$0xff]
    %v1652 = vld [vmem:[#allocation4 + $0x48] sm:$0xff]
    %v1653 = vld [vmem:[#allocation4 + $0x50] sm:$0xff]
    %v1654 = vld [vmem:[#allocation4 + $0x58] sm:$0xff]
    %v1655 = vld [vmem:[#allocation4 + $0x60] sm:$0xff]
    %v1656 = vld [vmem:[#allocation4 + $0x68] sm:$0xff]
    %v1657 = vld [vmem:[#allocation4 + $0x70] sm:$0xff]
    %v1658 = vld [vmem:[#allocation4 + $0x78] sm:$0xff]
    %v1659 = vld [vmem:[#allocation4 + $0x80] sm:$0xff]
    %v1660 = vld [vmem:[#allocation4 + $0x88] sm:$0xff]
    %v1661 = vld [vmem:[#allocation4 + $0x90] sm:$0xff]
    %v1662 = vld [vmem:[#allocation4 + $0x98] sm:$0xff]
    %v1663 = vld [vmem:[#allocation4 + $0xa0] sm:$0xff]
    %v1664 = vld [vmem:[#allocation4 + $0xa8] sm:$0xff]
    %v1665 = vld [vmem:[#allocation4 + $0xb0] sm:$0xff]
    %v1666 = vld [vmem:[#allocation4 + $0xb8] sm:$0xff]
    %v1667 = vld [vmem:[#allocation4 + $0xc0] sm:$0xff]
    %v1668 = vld [vmem:[#allocation4 + $0xc8] sm:$0xff]
    %v1669 = vld [vmem:[#allocation4 + $0xd0] sm:$0xff]
    %v1670 = vld [vmem:[#allocation4 + $0xd8] sm:$0xff]
    %v1671 = vld [vmem:[#allocation4 + $0xe0] sm:$0xff]
    %v1672 = vld [vmem:[#allocation4 + $0xe8] sm:$0xff]
    %v1673 = vld [vmem:[#allocation4 + $0xf0] sm:$0xff]
    %v1674 = vld [vmem:[#allocation4 + $0xf8] sm:$0xff]
    %v1675 = vld [vmem:[#allocation4 + $0x100] sm:$0xff]
    %v1676 = vld [vmem:[#allocation4 + $0x108] sm:$0xff]
    %v1677 = vld [vmem:[#allocation4 + $0x110] sm:$0xff]
    %v1678 = vld [vmem:[#allocation4 + $0x118] sm:$0xff]
    %v1679 = vld [vmem:[#allocation4 + $0x120] sm:$0xff]
    %v1680 = vld [vmem:[#allocation4 + $0x128] sm:$0xff]
    %v1681 = vld [vmem:[#allocation4 + $0x130] sm:$0xff]
    %v1682 = vld [vmem:[#allocation4 + $0x138] sm:$0xff]
    %v1683 = vld [vmem:[#allocation4 + $0x140] sm:$0xff]
    %v1684 = vld [vmem:[#allocation4 + $0x148] sm:$0xff]
    %v1685 = vld [vmem:[#allocation4 + $0x150] sm:$0xff]
    %v1686 = vld [vmem:[#allocation4 + $0x158] sm:$0xff]
    %v1687 = vld [vmem:[#allocation4 + $0x160] sm:$0xff]
    %v1688 = vld [vmem:[#allocation4 + $0x168] sm:$0xff]
    %v1689 = vld [vmem:[#allocation4 + $0x170] sm:$0xff]
    %v1690 = vld [vmem:[#allocation4 + $0x178] sm:$0xff]
    %v1691 = vld [vmem:[#allocation4 + $0x180] sm:$0xff]
    %v1692 = vld [vmem:[#allocation4 + $0x188] sm:$0xff]
    %v1693 = vld [vmem:[#allocation4 + $0x190] sm:$0xff]
    %v1694 = vld [vmem:[#allocation4 + $0x198] sm:$0xff]
    %v1695 = vld [vmem:[#allocation4 + $0x1a0] sm:$0xff]
    %v1696 = vld [vmem:[#allocation4 + $0x1a8] sm:$0xff]
    %v1697 = vld [vmem:[#allocation4 + $0x1b0] sm:$0xff]
    %v1698 = vld [vmem:[#allocation4 + $0x1b8] sm:$0xff]
    %v1699 = vld [vmem:[#allocation4 + $0x1c0] sm:$0xff]
    %v1700 = vld [vmem:[#allocation4 + $0x1c8] sm:$0xff]
    %v1701 = vld [vmem:[#allocation4 + $0x1d0] sm:$0xff]
    %v1702 = vld [vmem:[#allocation4 + $0x1d8] sm:$0xff]
    %v1703 = vld [vmem:[#allocation4 + $0x1e0] sm:$0xff]
    %v1704 = vld [vmem:[#allocation4 + $0x1e8] sm:$0xff]
    %v1705 = vld [vmem:[#allocation4 + $0x1f0] sm:$0xff]
    %v1706 = vld [vmem:[#allocation4 + $0x1f8] sm:$0xff]
    %v1707 = vld [vmem:[#allocation4 + $0x200] sm:$0xff]
    %v1708 = vld [vmem:[#allocation4 + $0x208] sm:$0xff]
    %v1709 = vld [vmem:[#allocation4 + $0x210] sm:$0xff]
    %v1710 = vld [vmem:[#allocation4 + $0x218] sm:$0xff]
    %v1711 = vld [vmem:[#allocation4 + $0x220] sm:$0xff]
    %v1712 = vld [vmem:[#allocation4 + $0x228] sm:$0xff]
    %v1713 = vld [vmem:[#allocation4 + $0x230] sm:$0xff]
    %v1714 = vld [vmem:[#allocation4 + $0x238] sm:$0xff]
    %v1715 = vld [vmem:[#allocation4 + $0x240] sm:$0xff]
    %v1716 = vld [vmem:[#allocation4 + $0x248] sm:$0xff]
    %v1717 = vld [vmem:[#allocation4 + $0x250] sm:$0xff]
    %v1718 = vld [vmem:[#allocation4 + $0x258] sm:$0xff]
    %v1719 = vld [vmem:[#allocation4 + $0x260] sm:$0xff]
    %v1720 = vld [vmem:[#allocation4 + $0x268] sm:$0xff]
    %v1721 = vld [vmem:[#allocation4 + $0x270] sm:$0xff]
    %v1722 = vld [vmem:[#allocation4 + $0x278] sm:$0xff]
    %v1723 = vld [vmem:[#allocation4 + $0x280] sm:$0xff]
    %v1724 = vld [vmem:[#allocation4 + $0x288] sm:$0xff]
    %v1725 = vld [vmem:[#allocation4 + $0x290] sm:$0xff]
    %v1726 = vld [vmem:[#allocation4 + $0x298] sm:$0xff]
    %v1727 = vld [vmem:[#allocation4 + $0x2a0] sm:$0xff]
    %v1728 = vld [vmem:[#allocation4 + $0x2a8] sm:$0xff]
    %v1729 = vld [vmem:[#allocation4 + $0x2b0] sm:$0xff]
    %v1730 = vld [vmem:[#allocation4 + $0x2b8] sm:$0xff]
    %v1731 = vld [vmem:[#allocation4 + $0x2c0] sm:$0xff]
    %v1732 = vld [vmem:[#allocation4 + $0x2c8] sm:$0xff]
    %v1733 = vld [vmem:[#allocation4 + $0x2d0] sm:$0xff]
    %v1734 = vld [vmem:[#allocation4 + $0x2d8] sm:$0xff]
    %v1735 = vld [vmem:[#allocation4 + $0x2e0] sm:$0xff]
    %v1736 = vld [vmem:[#allocation4 + $0x2e8] sm:$0xff]
    %v1737 = vld [vmem:[#allocation4 + $0x2f0] sm:$0xff]
    %v1738 = vld [vmem:[#allocation4 + $0x2f8] sm:$0xff]
    %v1739 = vld [vmem:[#allocation4 + $0x300] sm:$0xff]
    %v1740 = vld [vmem:[#allocation4 + $0x308] sm:$0xff]
    %v1741 = vld [vmem:[#allocation4 + $0x310] sm:$0xff]
    %v1742 = vld [vmem:[#allocation4 + $0x318] sm:$0xff]
    %v1743 = vld [vmem:[#allocation4 + $0x320] sm:$0xff]
    %v1744 = vld [vmem:[#allocation4 + $0x328] sm:$0xff]
    %v1745 = vld [vmem:[#allocation4 + $0x330] sm:$0xff]
    %v1746 = vld [vmem:[#allocation4 + $0x338] sm:$0xff]
    %v1747 = vld [vmem:[#allocation4 + $0x340] sm:$0xff]
    %v1748 = vld [vmem:[#allocation4 + $0x348] sm:$0xff]
    %v1749 = vld [vmem:[#allocation4 + $0x350] sm:$0xff]
    %v1750 = vld [vmem:[#allocation4 + $0x358] sm:$0xff]
    %v1751 = vld [vmem:[#allocation4 + $0x360] sm:$0xff]
    %v1752 = vld [vmem:[#allocation4 + $0x368] sm:$0xff]
    %v1753 = vld [vmem:[#allocation4 + $0x370] sm:$0xff]
    %v1754 = vld [vmem:[#allocation4 + $0x378] sm:$0xff]
    %v1755 = vld [vmem:[#allocation4 + $0x380] sm:$0xff]
    %v1756 = vld [vmem:[#allocation4 + $0x388] sm:$0xff]
    %v1757 = vld [vmem:[#allocation4 + $0x390] sm:$0xff]
    %v1758 = vld [vmem:[#allocation4 + $0x398] sm:$0xff]
    %v1759 = vld [vmem:[#allocation4 + $0x3a0] sm:$0xff]
    %v1760 = vld [vmem:[#allocation4 + $0x3a8] sm:$0xff]
    %v1761 = vld [vmem:[#allocation4 + $0x3b0] sm:$0xff]
    %v1762 = vld [vmem:[#allocation4 + $0x3b8] sm:$0xff]
    %v1763 = vld [vmem:[#allocation4 + $0x3c0] sm:$0xff]
    %v1764 = vld [vmem:[#allocation4 + $0x3c8] sm:$0xff]
    %v1765 = vld [vmem:[#allocation4 + $0x3d0] sm:$0xff]
    %v1766 = vld [vmem:[#allocation4 + $0x3d8] sm:$0xff]
    %v1767 = vld [vmem:[#allocation4 + $0x3e0] sm:$0xff]
    %v1768 = vld [vmem:[#allocation4 + $0x3e8] sm:$0xff]
    %v1769 = vld [vmem:[#allocation4 + $0x3f0] sm:$0xff]
    %v1770 = vld [vmem:[#allocation4 + $0x3f8] sm:$0xff]
    %v1771 = vld [vmem:[%s4] sm:$0xf]
    %v1773 = vlaneseq
    %v1774 = vshrl.u32 %v1773, 7
    %v1775 = vsub.s32 0, %v1774
    %v1776 = vrot.slane %v1771, %v1775
    %v1777 = vlaneseq
    %v1778 = vshrl.u32 %v1777, 7
    %v1779 = vsub.s32 1, %v1778
    %v1780 = vrot.slane %v1771, %v1779
    %v1781 = vlaneseq
    %v1782 = vshrl.u32 %v1781, 7
    %v1783 = vsub.s32 2, %v1782
    %v1784 = vrot.slane %v1771, %v1783
    %v1785 = vlaneseq
    %v1786 = vshrl.u32 %v1785, 7
    %v1787 = vsub.s32 3, %v1786
    %v1788 = vrot.slane %v1771, %v1787
    %v1921 = vunpack.c.l.b16 %v1643
    %v1922 = vunpack.c.h.b16 %v1643
    %v1923 = vunpack.c.l.b16 %v1644
    %v1924 = vunpack.c.h.b16 %v1644
    %v1925 = vunpack.c.l.b16 %v1645
    %v1926 = vunpack.c.h.b16 %v1645
    %v1927 = vunpack.c.l.b16 %v1646
    %v1928 = vunpack.c.h.b16 %v1646
    %v1929 = vunpack.c.l.b16 %v1647
    %v1930 = vunpack.c.h.b16 %v1647
    %v1931 = vunpack.c.l.b16 %v1648
    %v1932 = vunpack.c.h.b16 %v1648
    %v1933 = vunpack.c.l.b16 %v1649
    %v1934 = vunpack.c.h.b16 %v1649
    %v1935 = vunpack.c.l.b16 %v1650
    %v1936 = vunpack.c.h.b16 %v1650
    %v1937 = vunpack.c.l.b16 %v1651
    %v1938 = vunpack.c.h.b16 %v1651
    %v1939 = vunpack.c.l.b16 %v1652
    %v1940 = vunpack.c.h.b16 %v1652
    %v1941 = vunpack.c.l.b16 %v1653
    %v1942 = vunpack.c.h.b16 %v1653
    %v1943 = vunpack.c.l.b16 %v1654
    %v1944 = vunpack.c.h.b16 %v1654
    %v1945 = vunpack.c.l.b16 %v1655
    %v1946 = vunpack.c.h.b16 %v1655
    %v1947 = vunpack.c.l.b16 %v1656
    %v1948 = vunpack.c.h.b16 %v1656
    %v1949 = vunpack.c.l.b16 %v1657
    %v1950 = vunpack.c.h.b16 %v1657
    %v1951 = vunpack.c.l.b16 %v1658
    %v1952 = vunpack.c.h.b16 %v1658
    %v1953 = vunpack.c.l.b16 %v1659
    %v1954 = vunpack.c.h.b16 %v1659
    %v1955 = vunpack.c.l.b16 %v1660
    %v1956 = vunpack.c.h.b16 %v1660
    %v1957 = vunpack.c.l.b16 %v1661
    %v1958 = vunpack.c.h.b16 %v1661
    %v1959 = vunpack.c.l.b16 %v1662
    %v1960 = vunpack.c.h.b16 %v1662
    %v1961 = vunpack.c.l.b16 %v1663
    %v1962 = vunpack.c.h.b16 %v1663
    %v1963 = vunpack.c.l.b16 %v1664
    %v1964 = vunpack.c.h.b16 %v1664
    %v1965 = vunpack.c.l.b16 %v1665
    %v1966 = vunpack.c.h.b16 %v1665
    %v1967 = vunpack.c.l.b16 %v1666
    %v1968 = vunpack.c.h.b16 %v1666
    %v1969 = vunpack.c.l.b16 %v1667
    %v1970 = vunpack.c.h.b16 %v1667
    %v1971 = vunpack.c.l.b16 %v1668
    %v1972 = vunpack.c.h.b16 %v1668
    %v1973 = vunpack.c.l.b16 %v1669
    %v1974 = vunpack.c.h.b16 %v1669
    %v1975 = vunpack.c.l.b16 %v1670
    %v1976 = vunpack.c.h.b16 %v1670
    %v1977 = vunpack.c.l.b16 %v1671
    %v1978 = vunpack.c.h.b16 %v1671
    %v1979 = vunpack.c.l.b16 %v1672
    %v1980 = vunpack.c.h.b16 %v1672
    %v1981 = vunpack.c.l.b16 %v1673
    %v1982 = vunpack.c.h.b16 %v1673
    %v1983 = vunpack.c.l.b16 %v1674
    %v1984 = vunpack.c.h.b16 %v1674
    %v1985 = vunpack.c.l.b16 %v1675
    %v1986 = vunpack.c.h.b16 %v1675
    %v1987 = vunpack.c.l.b16 %v1676
    %v1988 = vunpack.c.h.b16 %v1676
    %v1989 = vunpack.c.l.b16 %v1677
    %v1990 = vunpack.c.h.b16 %v1677
    %v1991 = vunpack.c.l.b16 %v1678
    %v1992 = vunpack.c.h.b16 %v1678
    %v1993 = vunpack.c.l.b16 %v1679
    %v1994 = vunpack.c.h.b16 %v1679
    %v1995 = vunpack.c.l.b16 %v1680
    %v1996 = vunpack.c.h.b16 %v1680
    %v1997 = vunpack.c.l.b16 %v1681
    %v1998 = vunpack.c.h.b16 %v1681
    %v1999 = vunpack.c.l.b16 %v1682
    %v2000 = vunpack.c.h.b16 %v1682
    %v2001 = vunpack.c.l.b16 %v1683
    %v2002 = vunpack.c.h.b16 %v1683
    %v2003 = vunpack.c.l.b16 %v1684
    %v2004 = vunpack.c.h.b16 %v1684
    %v2005 = vunpack.c.l.b16 %v1685
    %v2006 = vunpack.c.h.b16 %v1685
    %v2007 = vunpack.c.l.b16 %v1686
    %v2008 = vunpack.c.h.b16 %v1686
    %v2009 = vunpack.c.l.b16 %v1687
    %v2010 = vunpack.c.h.b16 %v1687
    %v2011 = vunpack.c.l.b16 %v1688
    %v2012 = vunpack.c.h.b16 %v1688
    %v2013 = vunpack.c.l.b16 %v1689
    %v2014 = vunpack.c.h.b16 %v1689
    %v2015 = vunpack.c.l.b16 %v1690
    %v2016 = vunpack.c.h.b16 %v1690
    %v2017 = vunpack.c.l.b16 %v1691
    %v2018 = vunpack.c.h.b16 %v1691
    %v2019 = vunpack.c.l.b16 %v1692
    %v2020 = vunpack.c.h.b16 %v1692
    %v2021 = vunpack.c.l.b16 %v1693
    %v2022 = vunpack.c.h.b16 %v1693
    %v2023 = vunpack.c.l.b16 %v1694
    %v2024 = vunpack.c.h.b16 %v1694
    %v2025 = vunpack.c.l.b16 %v1695
    %v2026 = vunpack.c.h.b16 %v1695
    %v2027 = vunpack.c.l.b16 %v1696
    %v2028 = vunpack.c.h.b16 %v1696
    %v2029 = vunpack.c.l.b16 %v1697
    %v2030 = vunpack.c.h.b16 %v1697
    %v2031 = vunpack.c.l.b16 %v1698
    %v2032 = vunpack.c.h.b16 %v1698
    %v2033 = vunpack.c.l.b16 %v1699
    %v2034 = vunpack.c.h.b16 %v1699
    %v2035 = vunpack.c.l.b16 %v1700
    %v2036 = vunpack.c.h.b16 %v1700
    %v2037 = vunpack.c.l.b16 %v1701
    %v2038 = vunpack.c.h.b16 %v1701
    %v2039 = vunpack.c.l.b16 %v1702
    %v2040 = vunpack.c.h.b16 %v1702
    %v2041 = vunpack.c.l.b16 %v1703
    %v2042 = vunpack.c.h.b16 %v1703
    %v2043 = vunpack.c.l.b16 %v1704
    %v2044 = vunpack.c.h.b16 %v1704
    %v2045 = vunpack.c.l.b16 %v1705
    %v2046 = vunpack.c.h.b16 %v1705
    %v2047 = vunpack.c.l.b16 %v1706
    %v2048 = vunpack.c.h.b16 %v1706
    %v2049 = vunpack.c.l.b16 %v1707
    %v2050 = vunpack.c.h.b16 %v1707
    %v2051 = vunpack.c.l.b16 %v1708
    %v2052 = vunpack.c.h.b16 %v1708
    %v2053 = vunpack.c.l.b16 %v1709
    %v2054 = vunpack.c.h.b16 %v1709
    %v2055 = vunpack.c.l.b16 %v1710
    %v2056 = vunpack.c.h.b16 %v1710
    %v2057 = vunpack.c.l.b16 %v1711
    %v2058 = vunpack.c.h.b16 %v1711
    %v2059 = vunpack.c.l.b16 %v1712
    %v2060 = vunpack.c.h.b16 %v1712
    %v2061 = vunpack.c.l.b16 %v1713
    %v2062 = vunpack.c.h.b16 %v1713
    %v2063 = vunpack.c.l.b16 %v1714
    %v2064 = vunpack.c.h.b16 %v1714
    %v2065 = vunpack.c.l.b16 %v1715
    %v2066 = vunpack.c.h.b16 %v1715
    %v2067 = vunpack.c.l.b16 %v1716
    %v2068 = vunpack.c.h.b16 %v1716
    %v2069 = vunpack.c.l.b16 %v1717
    %v2070 = vunpack.c.h.b16 %v1717
    %v2071 = vunpack.c.l.b16 %v1718
    %v2072 = vunpack.c.h.b16 %v1718
    %v2073 = vunpack.c.l.b16 %v1719
    %v2074 = vunpack.c.h.b16 %v1719
    %v2075 = vunpack.c.l.b16 %v1720
    %v2076 = vunpack.c.h.b16 %v1720
    %v2077 = vunpack.c.l.b16 %v1721
    %v2078 = vunpack.c.h.b16 %v1721
    %v2079 = vunpack.c.l.b16 %v1722
    %v2080 = vunpack.c.h.b16 %v1722
    %v2081 = vunpack.c.l.b16 %v1723
    %v2082 = vunpack.c.h.b16 %v1723
    %v2083 = vunpack.c.l.b16 %v1724
    %v2084 = vunpack.c.h.b16 %v1724
    %v2085 = vunpack.c.l.b16 %v1725
    %v2086 = vunpack.c.h.b16 %v1725
    %v2087 = vunpack.c.l.b16 %v1726
    %v2088 = vunpack.c.h.b16 %v1726
    %v2089 = vunpack.c.l.b16 %v1727
    %v2090 = vunpack.c.h.b16 %v1727
    %v2091 = vunpack.c.l.b16 %v1728
    %v2092 = vunpack.c.h.b16 %v1728
    %v2093 = vunpack.c.l.b16 %v1729
    %v2094 = vunpack.c.h.b16 %v1729
    %v2095 = vunpack.c.l.b16 %v1730
    %v2096 = vunpack.c.h.b16 %v1730
    %v2097 = vunpack.c.l.b16 %v1731
    %v2098 = vunpack.c.h.b16 %v1731
    %v2099 = vunpack.c.l.b16 %v1732
    %v2100 = vunpack.c.h.b16 %v1732
    %v2101 = vunpack.c.l.b16 %v1733
    %v2102 = vunpack.c.h.b16 %v1733
    %v2103 = vunpack.c.l.b16 %v1734
    %v2104 = vunpack.c.h.b16 %v1734
    %v2105 = vunpack.c.l.b16 %v1735
    %v2106 = vunpack.c.h.b16 %v1735
    %v2107 = vunpack.c.l.b16 %v1736
    %v2108 = vunpack.c.h.b16 %v1736
    %v2109 = vunpack.c.l.b16 %v1737
    %v2110 = vunpack.c.h.b16 %v1737
    %v2111 = vunpack.c.l.b16 %v1738
    %v2112 = vunpack.c.h.b16 %v1738
    %v2113 = vunpack.c.l.b16 %v1739
    %v2114 = vunpack.c.h.b16 %v1739
    %v2115 = vunpack.c.l.b16 %v1740
    %v2116 = vunpack.c.h.b16 %v1740
    %v2117 = vunpack.c.l.b16 %v1741
    %v2118 = vunpack.c.h.b16 %v1741
    %v2119 = vunpack.c.l.b16 %v1742
    %v2120 = vunpack.c.h.b16 %v1742
    %v2121 = vunpack.c.l.b16 %v1743
    %v2122 = vunpack.c.h.b16 %v1743
    %v2123 = vunpack.c.l.b16 %v1744
    %v2124 = vunpack.c.h.b16 %v1744
    %v2125 = vunpack.c.l.b16 %v1745
    %v2126 = vunpack.c.h.b16 %v1745
    %v2127 = vunpack.c.l.b16 %v1746
    %v2128 = vunpack.c.h.b16 %v1746
    %v2129 = vunpack.c.l.b16 %v1747
    %v2130 = vunpack.c.h.b16 %v1747
    %v2131 = vunpack.c.l.b16 %v1748
    %v2132 = vunpack.c.h.b16 %v1748
    %v2133 = vunpack.c.l.b16 %v1749
    %v2134 = vunpack.c.h.b16 %v1749
    %v2135 = vunpack.c.l.b16 %v1750
    %v2136 = vunpack.c.h.b16 %v1750
    %v2137 = vunpack.c.l.b16 %v1751
    %v2138 = vunpack.c.h.b16 %v1751
    %v2139 = vunpack.c.l.b16 %v1752
    %v2140 = vunpack.c.h.b16 %v1752
    %v2141 = vunpack.c.l.b16 %v1753
    %v2142 = vunpack.c.h.b16 %v1753
    %v2143 = vunpack.c.l.b16 %v1754
    %v2144 = vunpack.c.h.b16 %v1754
    %v2145 = vunpack.c.l.b16 %v1755
    %v2146 = vunpack.c.h.b16 %v1755
    %v2147 = vunpack.c.l.b16 %v1756
    %v2148 = vunpack.c.h.b16 %v1756
    %v2149 = vunpack.c.l.b16 %v1757
    %v2150 = vunpack.c.h.b16 %v1757
    %v2151 = vunpack.c.l.b16 %v1758
    %v2152 = vunpack.c.h.b16 %v1758
    %v2153 = vunpack.c.l.b16 %v1759
    %v2154 = vunpack.c.h.b16 %v1759
    %v2155 = vunpack.c.l.b16 %v1760
    %v2156 = vunpack.c.h.b16 %v1760
    %v2157 = vunpack.c.l.b16 %v1761
    %v2158 = vunpack.c.h.b16 %v1761
    %v2159 = vunpack.c.l.b16 %v1762
    %v2160 = vunpack.c.h.b16 %v1762
    %v2161 = vunpack.c.l.b16 %v1763
    %v2162 = vunpack.c.h.b16 %v1763
    %v2163 = vunpack.c.l.b16 %v1764
    %v2164 = vunpack.c.h.b16 %v1764
    %v2165 = vunpack.c.l.b16 %v1765
    %v2166 = vunpack.c.h.b16 %v1765
    %v2167 = vunpack.c.l.b16 %v1766
    %v2168 = vunpack.c.h.b16 %v1766
    %v2169 = vunpack.c.l.b16 %v1767
    %v2170 = vunpack.c.h.b16 %v1767
    %v2171 = vunpack.c.l.b16 %v1768
    %v2172 = vunpack.c.h.b16 %v1768
    %v2173 = vunpack.c.l.b16 %v1769
    %v2174 = vunpack.c.h.b16 %v1769
    %v2175 = vunpack.c.l.b16 %v1770
    %v2176 = vunpack.c.h.b16 %v1770
    %v2177 = vpack.c.b16 %v1925, %v1921
    %v2178 = vpack.c.b16 %v1926, %v1922
    %v2179 = vpack.c.b16 %v1927, %v1923
    %v2180 = vpack.c.b16 %v1928, %v1924
    %v2181 = vpack.c.b16 %v1933, %v1929
    %v2182 = vpack.c.b16 %v1934, %v1930
    %v2183 = vpack.c.b16 %v1935, %v1931
    %v2184 = vpack.c.b16 %v1936, %v1932
    %v2185 = vpack.c.b16 %v1941, %v1937
    %v2186 = vpack.c.b16 %v1942, %v1938
    %v2187 = vpack.c.b16 %v1943, %v1939
    %v2188 = vpack.c.b16 %v1944, %v1940
    %v2189 = vpack.c.b16 %v1949, %v1945
    %v2190 = vpack.c.b16 %v1950, %v1946
    %v2191 = vpack.c.b16 %v1951, %v1947
    %v2192 = vpack.c.b16 %v1952, %v1948
    %v2193 = vpack.c.b16 %v1957, %v1953
    %v2194 = vpack.c.b16 %v1958, %v1954
    %v2195 = vpack.c.b16 %v1959, %v1955
    %v2196 = vpack.c.b16 %v1960, %v1956
    %v2197 = vpack.c.b16 %v1965, %v1961
    %v2198 = vpack.c.b16 %v1966, %v1962
    %v2199 = vpack.c.b16 %v1967, %v1963
    %v2200 = vpack.c.b16 %v1968, %v1964
    %v2201 = vpack.c.b16 %v1973, %v1969
    %v2202 = vpack.c.b16 %v1974, %v1970
    %v2203 = vpack.c.b16 %v1975, %v1971
    %v2204 = vpack.c.b16 %v1976, %v1972
    %v2205 = vpack.c.b16 %v1981, %v1977
    %v2206 = vpack.c.b16 %v1982, %v1978
    %v2207 = vpack.c.b16 %v1983, %v1979
    %v2208 = vpack.c.b16 %v1984, %v1980
    %v2209 = vpack.c.b16 %v1989, %v1985
    %v2210 = vpack.c.b16 %v1990, %v1986
    %v2211 = vpack.c.b16 %v1991, %v1987
    %v2212 = vpack.c.b16 %v1992, %v1988
    %v2213 = vpack.c.b16 %v1997, %v1993
    %v2214 = vpack.c.b16 %v1998, %v1994
    %v2215 = vpack.c.b16 %v1999, %v1995
    %v2216 = vpack.c.b16 %v2000, %v1996
    %v2217 = vpack.c.b16 %v2005, %v2001
    %v2218 = vpack.c.b16 %v2006, %v2002
    %v2219 = vpack.c.b16 %v2007, %v2003
    %v2220 = vpack.c.b16 %v2008, %v2004
    %v2221 = vpack.c.b16 %v2013, %v2009
    %v2222 = vpack.c.b16 %v2014, %v2010
    %v2223 = vpack.c.b16 %v2015, %v2011
    %v2224 = vpack.c.b16 %v2016, %v2012
    %v2225 = vpack.c.b16 %v2021, %v2017
    %v2226 = vpack.c.b16 %v2022, %v2018
    %v2227 = vpack.c.b16 %v2023, %v2019
    %v2228 = vpack.c.b16 %v2024, %v2020
    %v2229 = vpack.c.b16 %v2029, %v2025
    %v2230 = vpack.c.b16 %v2030, %v2026
    %v2231 = vpack.c.b16 %v2031, %v2027
    %v2232 = vpack.c.b16 %v2032, %v2028
    %v2233 = vpack.c.b16 %v2037, %v2033
    %v2234 = vpack.c.b16 %v2038, %v2034
    %v2235 = vpack.c.b16 %v2039, %v2035
    %v2236 = vpack.c.b16 %v2040, %v2036
    %v2237 = vpack.c.b16 %v2045, %v2041
    %v2238 = vpack.c.b16 %v2046, %v2042
    %v2239 = vpack.c.b16 %v2047, %v2043
    %v2240 = vpack.c.b16 %v2048, %v2044
    %v2241 = vpack.c.b16 %v2053, %v2049
    %v2242 = vpack.c.b16 %v2054, %v2050
    %v2243 = vpack.c.b16 %v2055, %v2051
    %v2244 = vpack.c.b16 %v2056, %v2052
    %v2245 = vpack.c.b16 %v2061, %v2057
    %v2246 = vpack.c.b16 %v2062, %v2058
    %v2247 = vpack.c.b16 %v2063, %v2059
    %v2248 = vpack.c.b16 %v2064, %v2060
    %v2249 = vpack.c.b16 %v2069, %v2065
    %v2250 = vpack.c.b16 %v2070, %v2066
    %v2251 = vpack.c.b16 %v2071, %v2067
    %v2252 = vpack.c.b16 %v2072, %v2068
    %v2253 = vpack.c.b16 %v2077, %v2073
    %v2254 = vpack.c.b16 %v2078, %v2074
    %v2255 = vpack.c.b16 %v2079, %v2075
    %v2256 = vpack.c.b16 %v2080, %v2076
    %v2257 = vpack.c.b16 %v2085, %v2081
    %v2258 = vpack.c.b16 %v2086, %v2082
    %v2259 = vpack.c.b16 %v2087, %v2083
    %v2260 = vpack.c.b16 %v2088, %v2084
    %v2261 = vpack.c.b16 %v2093, %v2089
    %v2262 = vpack.c.b16 %v2094, %v2090
    %v2263 = vpack.c.b16 %v2095, %v2091
    %v2264 = vpack.c.b16 %v2096, %v2092
    %v2265 = vpack.c.b16 %v2101, %v2097
    %v2266 = vpack.c.b16 %v2102, %v2098
    %v2267 = vpack.c.b16 %v2103, %v2099
    %v2268 = vpack.c.b16 %v2104, %v2100
    %v2269 = vpack.c.b16 %v2109, %v2105
    %v2270 = vpack.c.b16 %v2110, %v2106
    %v2271 = vpack.c.b16 %v2111, %v2107
    %v2272 = vpack.c.b16 %v2112, %v2108
    %v2273 = vpack.c.b16 %v2117, %v2113
    %v2274 = vpack.c.b16 %v2118, %v2114
    %v2275 = vpack.c.b16 %v2119, %v2115
    %v2276 = vpack.c.b16 %v2120, %v2116
    %v2277 = vpack.c.b16 %v2125, %v2121
    %v2278 = vpack.c.b16 %v2126, %v2122
    %v2279 = vpack.c.b16 %v2127, %v2123
    %v2280 = vpack.c.b16 %v2128, %v2124
    %v2281 = vpack.c.b16 %v2133, %v2129
    %v2282 = vpack.c.b16 %v2134, %v2130
    %v2283 = vpack.c.b16 %v2135, %v2131
    %v2284 = vpack.c.b16 %v2136, %v2132
    %v2285 = vpack.c.b16 %v2141, %v2137
    %v2286 = vpack.c.b16 %v2142, %v2138
    %v2287 = vpack.c.b16 %v2143, %v2139
    %v2288 = vpack.c.b16 %v2144, %v2140
    %v2289 = vpack.c.b16 %v2149, %v2145
    %v2290 = vpack.c.b16 %v2150, %v2146
    %v2291 = vpack.c.b16 %v2151, %v2147
    %v2292 = vpack.c.b16 %v2152, %v2148
    %v2293 = vpack.c.b16 %v2157, %v2153
    %v2294 = vpack.c.b16 %v2158, %v2154
    %v2295 = vpack.c.b16 %v2159, %v2155
    %v2296 = vpack.c.b16 %v2160, %v2156
    %v2297 = vpack.c.b16 %v2165, %v2161
    %v2298 = vpack.c.b16 %v2166, %v2162
    %v2299 = vpack.c.b16 %v2167, %v2163
    %v2300 = vpack.c.b16 %v2168, %v2164
    %v2301 = vpack.c.b16 %v2173, %v2169
    %v2302 = vpack.c.b16 %v2174, %v2170
    %v2303 = vpack.c.b16 %v2175, %v2171
    %v2304 = vpack.c.b16 %v2176, %v2172
    %2433 = vmatprep.subr.bf16.mxu0 %v2178
    %2434 = vmatpush1.bf16.msra.mxu0 %v2177
    %2435 = vmatprep.subr.bf16.mxu0 %v2182
    %2436 = vmatpush1.bf16.msra.mxu0 %v2181
    %2437 = vmatprep.subr.bf16.mxu0 %v2186
    %2438 = vmatpush1.bf16.msra.mxu0 %v2185
    %2439 = vmatprep.subr.bf16.mxu0 %v2190
    %2440 = vmatpush1.bf16.msra.mxu0 %v2189
    %2441 = vmatprep.subr.bf16.mxu0 %v2194
    %2442 = vmatpush1.bf16.msra.mxu0 %v2193
    %2443 = vmatprep.subr.bf16.mxu0 %v2198
    %2444 = vmatpush1.bf16.msra.mxu0 %v2197
    %2445 = vmatprep.subr.bf16.mxu0 %v2202
    %2446 = vmatpush1.bf16.msra.mxu0 %v2201
    %2447 = vmatprep.subr.bf16.mxu0 %v2206
    %2448 = vmatpush1.bf16.msra.mxu0 %v2205
    %2449 = vmatprep.subr.bf16.mxu0 %v2210
    %2450 = vmatpush1.bf16.msra.mxu0 %v2209
    %2451 = vmatprep.subr.bf16.mxu0 %v2214
    %2452 = vmatpush1.bf16.msra.mxu0 %v2213
    %2453 = vmatprep.subr.bf16.mxu0 %v2218
    %2454 = vmatpush1.bf16.msra.mxu0 %v2217
    %2455 = vmatprep.subr.bf16.mxu0 %v2222
    %2456 = vmatpush1.bf16.msra.mxu0 %v2221
    %2457 = vmatprep.subr.bf16.mxu0 %v2226
    %2458 = vmatpush1.bf16.msra.mxu0 %v2225
    %2459 = vmatprep.subr.bf16.mxu0 %v2230
    %2460 = vmatpush1.bf16.msra.mxu0 %v2229
    %2461 = vmatprep.subr.bf16.mxu0 %v2234
    %2462 = vmatpush1.bf16.msra.mxu0 %v2233
    %2463 = vmatprep.subr.bf16.mxu0 %v2238
    %2464 = vmatpush1.bf16.msra.mxu0 %v2237
    %2465 = vmatprep.mubr.bf16.mxu0 %v1640
    %2466 = vmatmul.mubr.bf16.gmra.mrb[0].mxu0 %v1639
    %v2467 = vpop.f32.mrb[0].mxu0
    %v2468 = vadd.f32 %v1776, %v2467
    %v2469 = vpop.f32.mrb[0].mxu0
    %v2470 = vadd.f32 %v1780, %v2469
    %v2471 = vpop.f32.mrb[0].mxu0
    %v2472 = vadd.f32 %v1776, %v2471
    %v2473 = vpop.f32.mrb[0].mxu0
    %v2474 = vadd.f32 %v1780, %v2473
    %2475 = vdwg.mxu0
    %2476 = vmatprep.subr.bf16.mxu0 %v2242
    %2477 = vmatpush1.bf16.msra.mxu0 %v2241
    %2478 = vmatprep.subr.bf16.mxu0 %v2246
    %2479 = vmatpush1.bf16.msra.mxu0 %v2245
    %2480 = vmatprep.subr.bf16.mxu0 %v2250
    %2481 = vmatpush1.bf16.msra.mxu0 %v2249
    %2482 = vmatprep.subr.bf16.mxu0 %v2254
    %2483 = vmatpush1.bf16.msra.mxu0 %v2253
    %2484 = vmatprep.subr.bf16.mxu0 %v2258
    %2485 = vmatpush1.bf16.msra.mxu0 %v2257
    %2486 = vmatprep.subr.bf16.mxu0 %v2262
    %2487 = vmatpush1.bf16.msra.mxu0 %v2261
    %2488 = vmatprep.subr.bf16.mxu0 %v2266
    %2489 = vmatpush1.bf16.msra.mxu0 %v2265
    %2490 = vmatprep.subr.bf16.mxu0 %v2270
    %2491 = vmatpush1.bf16.msra.mxu0 %v2269
    %2492 = vmatprep.subr.bf16.mxu0 %v2274
    %2493 = vmatpush1.bf16.msra.mxu0 %v2273
    %2494 = vmatprep.subr.bf16.mxu0 %v2278
    %2495 = vmatpush1.bf16.msra.mxu0 %v2277
    %2496 = vmatprep.subr.bf16.mxu0 %v2282
    %2497 = vmatpush1.bf16.msra.mxu0 %v2281
    %2498 = vmatprep.subr.bf16.mxu0 %v2286
    %2499 = vmatpush1.bf16.msra.mxu0 %v2285
    %2500 = vmatprep.subr.bf16.mxu0 %v2290
    %2501 = vmatpush1.bf16.msra.mxu0 %v2289
    %2502 = vmatprep.subr.bf16.mxu0 %v2294
    %2503 = vmatpush1.bf16.msra.mxu0 %v2293
    %2504 = vmatprep.subr.bf16.mxu0 %v2298
    %2505 = vmatpush1.bf16.msra.mxu0 %v2297
    %2506 = vmatprep.subr.bf16.mxu0 %v2302
    %2507 = vmatpush1.bf16.msra.mxu0 %v2301
    %2508 = vmatprep.mubr.bf16.mxu0 %v1642
    %2509 = vmatmul.mubr.bf16.gmra.mrb[0].mxu0 %v1641
    %v2510 = vpop.f32.mrb[0].mxu0
    %v2511 = vadd.f32 %v2468, %v2510
    %v2512 = vpop.f32.mrb[0].mxu0
    %v2513 = vadd.f32 %v2470, %v2512
    %v2514 = vpop.f32.mrb[0].mxu0
    %v2515 = vadd.f32 %v2472, %v2514
    %v2516 = vpop.f32.mrb[0].mxu0
    %v2517 = vadd.f32 %v2474, %v2516
    %2518 = vdwg.mxu0
    %2519 = vmatprep.subr.bf16.mxu0 %v2180
    %2520 = vmatpush1.bf16.msra.mxu0 %v2179
    %2521 = vmatprep.subr.bf16.mxu0 %v2184
    %2522 = vmatpush1.bf16.msra.mxu0 %v2183
    %2523 = vmatprep.subr.bf16.mxu0 %v2188
    %2524 = vmatpush1.bf16.msra.mxu0 %v2187
    %2525 = vmatprep.subr.bf16.mxu0 %v2192
    %2526 = vmatpush1.bf16.msra.mxu0 %v2191
    %2527 = vmatprep.subr.bf16.mxu0 %v2196
    %2528 = vmatpush1.bf16.msra.mxu0 %v2195
    %2529 = vmatprep.subr.bf16.mxu0 %v2200
    %2530 = vmatpush1.bf16.msra.mxu0 %v2199
    %2531 = vmatprep.subr.bf16.mxu0 %v2204
    %2532 = vmatpush1.bf16.msra.mxu0 %v2203
    %2533 = vmatprep.subr.bf16.mxu0 %v2208
    %2534 = vmatpush1.bf16.msra.mxu0 %v2207
    %2535 = vmatprep.subr.bf16.mxu0 %v2212
    %2536 = vmatpush1.bf16.msra.mxu0 %v2211
    %2537 = vmatprep.subr.bf16.mxu0 %v2216
    %2538 = vmatpush1.bf16.msra.mxu0 %v2215
    %2539 = vmatprep.subr.bf16.mxu0 %v2220
    %2540 = vmatpush1.bf16.msra.mxu0 %v2219
    %2541 = vmatprep.subr.bf16.mxu0 %v2224
    %2542 = vmatpush1.bf16.msra.mxu0 %v2223
    %2543 = vmatprep.subr.bf16.mxu0 %v2228
    %2544 = vmatpush1.bf16.msra.mxu0 %v2227
    %2545 = vmatprep.subr.bf16.mxu0 %v2232
    %2546 = vmatpush1.bf16.msra.mxu0 %v2231
    %2547 = vmatprep.subr.bf16.mxu0 %v2236
    %2548 = vmatpush1.bf16.msra.mxu0 %v2235
    %2549 = vmatprep.subr.bf16.mxu0 %v2240
    %2550 = vmatpush1.bf16.msra.mxu0 %v2239
    %2551 = vmatprep.mubr.bf16.mxu0 %v1640
    %2552 = vmatmul.mubr.bf16.gmra.mrb[0].mxu0 %v1639
    %v2553 = vpop.f32.mrb[0].mxu0
    %v2554 = vadd.f32 %v1784, %v2553
    %v2555 = vpop.f32.mrb[0].mxu0
    %v2556 = vadd.f32 %v1788, %v2555
    %v2557 = vpop.f32.mrb[0].mxu0
    %v2558 = vadd.f32 %v1784, %v2557
    %v2559 = vpop.f32.mrb[0].mxu0
    %v2560 = vadd.f32 %v1788, %v2559
    %2561 = vdwg.mxu0
    %2562 = vmatprep.subr.bf16.mxu0 %v2244
    %2563 = vmatpush1.bf16.msra.mxu0 %v2243
    %2564 = vmatprep.subr.bf16.mxu0 %v2248
    %2565 = vmatpush1.bf16.msra.mxu0 %v2247
    %2566 = vmatprep.subr.bf16.mxu0 %v2252
    %2567 = vmatpush1.bf16.msra.mxu0 %v2251
    %2568 = vmatprep.subr.bf16.mxu0 %v2256
    %2569 = vmatpush1.bf16.msra.mxu0 %v2255
    %2570 = vmatprep.subr.bf16.mxu0 %v2260
    %2571 = vmatpush1.bf16.msra.mxu0 %v2259
    %2572 = vmatprep.subr.bf16.mxu0 %v2264
    %2573 = vmatpush1.bf16.msra.mxu0 %v2263
    %2574 = vmatprep.subr.bf16.mxu0 %v2268
    %2575 = vmatpush1.bf16.msra.mxu0 %v2267
    %2576 = vmatprep.subr.bf16.mxu0 %v2272
    %2577 = vmatpush1.bf16.msra.mxu0 %v2271
    %2578 = vmatprep.subr.bf16.mxu0 %v2276
    %2579 = vmatpush1.bf16.msra.mxu0 %v2275
    %2580 = vmatprep.subr.bf16.mxu0 %v2280
    %2581 = vmatpush1.bf16.msra.mxu0 %v2279
    %2582 = vmatprep.subr.bf16.mxu0 %v2284
    %2583 = vmatpush1.bf16.msra.mxu0 %v2283
    %2584 = vmatprep.subr.bf16.mxu0 %v2288
    %2585 = vmatpush1.bf16.msra.mxu0 %v2287
    %2586 = vmatprep.subr.bf16.mxu0 %v2292
    %2587 = vmatpush1.bf16.msra.mxu0 %v2291
    %2588 = vmatprep.subr.bf16.mxu0 %v2296
    %2589 = vmatpush1.bf16.msra.mxu0 %v2295
    %2590 = vmatprep.subr.bf16.mxu0 %v2300
    %2591 = vmatpush1.bf16.msra.mxu0 %v2299
    %2592 = vmatprep.subr.bf16.mxu0 %v2304
    %2593 = vmatpush1.bf16.msra.mxu0 %v2303
    %2594 = vmatprep.mubr.bf16.mxu0 %v1642
    %2595 = vmatmul.mubr.bf16.gmra.mrb[0].mxu0 %v1641
    %v2596 = vpop.f32.mrb[0].mxu0
    %v2597 = vadd.f32 %v2554, %v2596
    %v2598 = vpop.f32.mrb[0].mxu0
    %v2599 = vadd.f32 %v2556, %v2598
    %v2600 = vpop.f32.mrb[0].mxu0
    %v2601 = vadd.f32 %v2558, %v2600
    %v2602 = vpop.f32.mrb[0].mxu0
    %v2603 = vadd.f32 %v2560, %v2602
    %2604 = vdwg.mxu0
    %v2605 = vpack.c.bf16 %v2515, %v2511
    %v2606 = vpack.c.bf16 %v2517, %v2513
    %v2607 = vpack.c.bf16 %v2601, %v2597
    %v2608 = vpack.c.bf16 %v2603, %v2599
    %v2609 = vmul.bf16 %v2605, 1056980736
    %v2610 = vmul.bf16 %v2606, 1056980736
    %v2611 = vmul.bf16 %v2607, 1056980736
    %v2612 = vmul.bf16 %v2608, 1056980736
    %v2613 = vtanh.bf16.pop %v2609
    %v2614 = vtanh.bf16.pop %v2610
    %v2615 = vtanh.bf16.pop %v2611
    %v2616 = vtanh.bf16.pop %v2612
    %v2617 = vmul.bf16 %v2613, 1056980736
    %v2618 = vmul.bf16 %v2614, 1056980736
    %v2619 = vmul.bf16 %v2615, 1056980736
    %v2620 = vmul.bf16 %v2616, 1056980736
    %v2621 = vadd.bf16 %v2617, 1056980736
    %v2622 = vadd.bf16 %v2618, 1056980736
    %v2623 = vadd.bf16 %v2619, 1056980736
    %v2624 = vadd.bf16 %v2620, 1056980736
    %v2625 = vld [vmem:[%s5] sm:$0xf]
    %v2626 = vld [vmem:[%s5 + $0x4] sm:$0xf]
    %v2627 = vld [vmem:[%s5 + $0x8] sm:$0xf]
    %v2628 = vld [vmem:[%s5 + $0xc] sm:$0xf]
    %v2629 = vld [vmem:[%s5 + $0x10] sm:$0xf]
    %v2630 = vld [vmem:[%s5 + $0x14] sm:$0xf]
    %v2631 = vld [vmem:[%s5 + $0x18] sm:$0xf]
    %v2632 = vld [vmem:[%s5 + $0x1c] sm:$0xf]
    %v2633 = vld [vmem:[%s5 + $0x20] sm:$0xf]
    %v2634 = vld [vmem:[%s5 + $0x24] sm:$0xf]
    %v2635 = vld [vmem:[%s5 + $0x28] sm:$0xf]
    %v2636 = vld [vmem:[%s5 + $0x2c] sm:$0xf]
    %v2637 = vld [vmem:[%s5 + $0x30] sm:$0xf]
    %v2638 = vld [vmem:[%s5 + $0x34] sm:$0xf]
    %v2639 = vld [vmem:[%s5 + $0x38] sm:$0xf]
    %v2640 = vld [vmem:[%s5 + $0x3c] sm:$0xf]
    %v2641 = vld [vmem:[%s5 + $0x40] sm:$0xf]
    %v2642 = vld [vmem:[%s5 + $0x44] sm:$0xf]
    %v2643 = vld [vmem:[%s5 + $0x48] sm:$0xf]
    %v2644 = vld [vmem:[%s5 + $0x4c] sm:$0xf]
    %v2645 = vld [vmem:[%s5 + $0x50] sm:$0xf]
    %v2646 = vld [vmem:[%s5 + $0x54] sm:$0xf]
    %v2647 = vld [vmem:[%s5 + $0x58] sm:$0xf]
    %v2648 = vld [vmem:[%s5 + $0x5c] sm:$0xf]
    %v2649 = vld [vmem:[%s5 + $0x60] sm:$0xf]
    %v2650 = vld [vmem:[%s5 + $0x64] sm:$0xf]
    %v2651 = vld [vmem:[%s5 + $0x68] sm:$0xf]
    %v2652 = vld [vmem:[%s5 + $0x6c] sm:$0xf]
    %v2653 = vld [vmem:[%s5 + $0x70] sm:$0xf]
    %v2654 = vld [vmem:[%s5 + $0x74] sm:$0xf]
    %v2655 = vld [vmem:[%s5 + $0x78] sm:$0xf]
    %v2656 = vld [vmem:[%s5 + $0x7c] sm:$0xf]
    %v2657 = vld [vmem:[%s5 + $0x80] sm:$0xf]
    %v2658 = vld [vmem:[%s5 + $0x84] sm:$0xf]
    %v2659 = vld [vmem:[%s5 + $0x88] sm:$0xf]
    %v2660 = vld [vmem:[%s5 + $0x8c] sm:$0xf]
    %v2661 = vld [vmem:[%s5 + $0x90] sm:$0xf]
    %v2662 = vld [vmem:[%s5 + $0x94] sm:$0xf]
    %v2663 = vld [vmem:[%s5 + $0x98] sm:$0xf]
    %v2664 = vld [vmem:[%s5 + $0x9c] sm:$0xf]
    %v2665 = vld [vmem:[%s5 + $0xa0] sm:$0xf]
    %v2666 = vld [vmem:[%s5 + $0xa4] sm:$0xf]
    %v2667 = vld [vmem:[%s5 + $0xa8] sm:$0xf]
    %v2668 = vld [vmem:[%s5 + $0xac] sm:$0xf]
    %v2669 = vld [vmem:[%s5 + $0xb0] sm:$0xf]
    %v2670 = vld [vmem:[%s5 + $0xb4] sm:$0xf]
    %v2671 = vld [vmem:[%s5 + $0xb8] sm:$0xf]
    %v2672 = vld [vmem:[%s5 + $0xbc] sm:$0xf]
    %v2673 = vld [vmem:[%s5 + $0xc0] sm:$0xf]
    %v2674 = vld [vmem:[%s5 + $0xc4] sm:$0xf]
    %v2675 = vld [vmem:[%s5 + $0xc8] sm:$0xf]
    %v2676 = vld [vmem:[%s5 + $0xcc] sm:$0xf]
    %v2677 = vld [vmem:[%s5 + $0xd0] sm:$0xf]
    %v2678 = vld [vmem:[%s5 + $0xd4] sm:$0xf]
    %v2679 = vld [vmem:[%s5 + $0xd8] sm:$0xf]
    %v2680 = vld [vmem:[%s5 + $0xdc] sm:$0xf]
    %v2681 = vld [vmem:[%s5 + $0xe0] sm:$0xf]
    %v2682 = vld [vmem:[%s5 + $0xe4] sm:$0xf]
    %v2683 = vld [vmem:[%s5 + $0xe8] sm:$0xf]
    %v2684 = vld [vmem:[%s5 + $0xec] sm:$0xf]
    %v2685 = vld [vmem:[%s5 + $0xf0] sm:$0xf]
    %v2686 = vld [vmem:[%s5 + $0xf4] sm:$0xf]
    %v2687 = vld [vmem:[%s5 + $0xf8] sm:$0xf]
    %v2688 = vld [vmem:[%s5 + $0xfc] sm:$0xf]
    %v2689 = vld [vmem:[%s6] sm:$0x1]
    %v2691 = vlaneseq
    %v2692 = vshrl.u32 %v2691, 7
    %v2693 = vsub.s32 0, %v2692
    %v2694 = vrot.slane %v2689, %v2693
    %v2760 = vunpack.c.l.b16 %v2625
    %v2761 = vunpack.c.l.b16 %v2626
    %v2762 = vunpack.c.l.b16 %v2627
    %v2763 = vunpack.c.l.b16 %v2628
    %v2764 = vunpack.c.l.b16 %v2629
    %v2765 = vunpack.c.l.b16 %v2630
    %v2766 = vunpack.c.l.b16 %v2631
    %v2767 = vunpack.c.l.b16 %v2632
    %v2768 = vunpack.c.l.b16 %v2633
    %v2769 = vunpack.c.l.b16 %v2634
    %v2770 = vunpack.c.l.b16 %v2635
    %v2771 = vunpack.c.l.b16 %v2636
    %v2772 = vunpack.c.l.b16 %v2637
    %v2773 = vunpack.c.l.b16 %v2638
    %v2774 = vunpack.c.l.b16 %v2639
    %v2775 = vunpack.c.l.b16 %v2640
    %v2776 = vunpack.c.l.b16 %v2641
    %v2777 = vunpack.c.l.b16 %v2642
    %v2778 = vunpack.c.l.b16 %v2643
    %v2779 = vunpack.c.l.b16 %v2644
    %v2780 = vunpack.c.l.b16 %v2645
    %v2781 = vunpack.c.l.b16 %v2646
    %v2782 = vunpack.c.l.b16 %v2647
    %v2783 = vunpack.c.l.b16 %v2648
    %v2784 = vunpack.c.l.b16 %v2649
    %v2785 = vunpack.c.l.b16 %v2650
    %v2786 = vunpack.c.l.b16 %v2651
    %v2787 = vunpack.c.l.b16 %v2652
    %v2788 = vunpack.c.l.b16 %v2653
    %v2789 = vunpack.c.l.b16 %v2654
    %v2790 = vunpack.c.l.b16 %v2655
    %v2791 = vunpack.c.l.b16 %v2656
    %v2792 = vunpack.c.l.b16 %v2657
    %v2793 = vunpack.c.l.b16 %v2658
    %v2794 = vunpack.c.l.b16 %v2659
    %v2795 = vunpack.c.l.b16 %v2660
    %v2796 = vunpack.c.l.b16 %v2661
    %v2797 = vunpack.c.l.b16 %v2662
    %v2798 = vunpack.c.l.b16 %v2663
    %v2799 = vunpack.c.l.b16 %v2664
    %v2800 = vunpack.c.l.b16 %v2665
    %v2801 = vunpack.c.l.b16 %v2666
    %v2802 = vunpack.c.l.b16 %v2667
    %v2803 = vunpack.c.l.b16 %v2668
    %v2804 = vunpack.c.l.b16 %v2669
    %v2805 = vunpack.c.l.b16 %v2670
    %v2806 = vunpack.c.l.b16 %v2671
    %v2807 = vunpack.c.l.b16 %v2672
    %v2808 = vunpack.c.l.b16 %v2673
    %v2809 = vunpack.c.l.b16 %v2674
    %v2810 = vunpack.c.l.b16 %v2675
    %v2811 = vunpack.c.l.b16 %v2676
    %v2812 = vunpack.c.l.b16 %v2677
    %v2813 = vunpack.c.l.b16 %v2678
    %v2814 = vunpack.c.l.b16 %v2679
    %v2815 = vunpack.c.l.b16 %v2680
    %v2816 = vunpack.c.l.b16 %v2681
    %v2817 = vunpack.c.l.b16 %v2682
    %v2818 = vunpack.c.l.b16 %v2683
    %v2819 = vunpack.c.l.b16 %v2684
    %v2820 = vunpack.c.l.b16 %v2685
    %v2821 = vunpack.c.l.b16 %v2686
    %v2822 = vunpack.c.l.b16 %v2687
    %v2823 = vunpack.c.l.b16 %v2688
    %v2824 = vpack.c.b16 %v2761, %v2760
    %v2825 = vpack.c.b16 %v2763, %v2762
    %v2826 = vpack.c.b16 %v2765, %v2764
    %v2827 = vpack.c.b16 %v2767, %v2766
    %v2828 = vpack.c.b16 %v2769, %v2768
    %v2829 = vpack.c.b16 %v2771, %v2770
    %v2830 = vpack.c.b16 %v2773, %v2772
    %v2831 = vpack.c.b16 %v2775, %v2774
    %v2832 = vpack.c.b16 %v2777, %v2776
    %v2833 = vpack.c.b16 %v2779, %v2778
    %v2834 = vpack.c.b16 %v2781, %v2780
    %v2835 = vpack.c.b16 %v2783, %v2782
    %v2836 = vpack.c.b16 %v2785, %v2784
    %v2837 = vpack.c.b16 %v2787, %v2786
    %v2838 = vpack.c.b16 %v2789, %v2788
    %v2839 = vpack.c.b16 %v2791, %v2790
    %v2840 = vpack.c.b16 %v2793, %v2792
    %v2841 = vpack.c.b16 %v2795, %v2794
    %v2842 = vpack.c.b16 %v2797, %v2796
    %v2843 = vpack.c.b16 %v2799, %v2798
    %v2844 = vpack.c.b16 %v2801, %v2800
    %v2845 = vpack.c.b16 %v2803, %v2802
    %v2846 = vpack.c.b16 %v2805, %v2804
    %v2847 = vpack.c.b16 %v2807, %v2806
    %v2848 = vpack.c.b16 %v2809, %v2808
    %v2849 = vpack.c.b16 %v2811, %v2810
    %v2850 = vpack.c.b16 %v2813, %v2812
    %v2851 = vpack.c.b16 %v2815, %v2814
    %v2852 = vpack.c.b16 %v2817, %v2816
    %v2853 = vpack.c.b16 %v2819, %v2818
    %v2854 = vpack.c.b16 %v2821, %v2820
    %v2855 = vpack.c.b16 %v2823, %v2822
    %2888 = vmatprep.subr.bf16.mxu0 0
    %2889 = vmatpush1.bf16.msra.mxu0 %v2824
    %2890 = vmatprep.subr.bf16.mxu0 0
    %2891 = vmatpush1.bf16.msra.mxu0 %v2825
    %2892 = vmatprep.subr.bf16.mxu0 0
    %2893 = vmatpush1.bf16.msra.mxu0 %v2826
    %2894 = vmatprep.subr.bf16.mxu0 0
    %2895 = vmatpush1.bf16.msra.mxu0 %v2827
    %2896 = vmatprep.subr.bf16.mxu0 0
    %2897 = vmatpush1.bf16.msra.mxu0 %v2828
    %2898 = vmatprep.subr.bf16.mxu0 0
    %2899 = vmatpush1.bf16.msra.mxu0 %v2829
    %2900 = vmatprep.subr.bf16.mxu0 0
    %2901 = vmatpush1.bf16.msra.mxu0 %v2830
    %2902 = vmatprep.subr.bf16.mxu0 0
    %2903 = vmatpush1.bf16.msra.mxu0 %v2831
    %2904 = vmatprep.subr.bf16.mxu0 0
    %2905 = vmatpush1.bf16.msra.mxu0 %v2832
    %2906 = vmatprep.subr.bf16.mxu0 0
    %2907 = vmatpush1.bf16.msra.mxu0 %v2833
    %2908 = vmatprep.subr.bf16.mxu0 0
    %2909 = vmatpush1.bf16.msra.mxu0 %v2834
    %2910 = vmatprep.subr.bf16.mxu0 0
    %2911 = vmatpush1.bf16.msra.mxu0 %v2835
    %2912 = vmatprep.subr.bf16.mxu0 0
    %2913 = vmatpush1.bf16.msra.mxu0 %v2836
    %2914 = vmatprep.subr.bf16.mxu0 0
    %2915 = vmatpush1.bf16.msra.mxu0 %v2837
    %2916 = vmatprep.subr.bf16.mxu0 0
    %2917 = vmatpush1.bf16.msra.mxu0 %v2838
    %2918 = vmatprep.subr.bf16.mxu0 0
    %2919 = vmatpush1.bf16.msra.mxu0 %v2839
    %2920 = vmatprep.mubr.bf16.mxu0 %v2622
    %2921 = vmatmul.mubr.bf16.gmra.mrb[0].mxu0 %v2621
    %v2922 = vpop.f32.mrb[0].mxu0
    %v2923 = vadd.f32 %v2694, %v2922
    %v2924 = vpop.f32.mrb[0].mxu0
    %v2925 = vpop.f32.mrb[0].mxu0
    %v2926 = vadd.f32 %v2694, %v2925
    %v2927 = vpop.f32.mrb[0].mxu0
    %2928 = vdwg.mxu0
    %2929 = vmatprep.subr.bf16.mxu0 0
    %2930 = vmatpush1.bf16.msra.mxu0 %v2840
    %2931 = vmatprep.subr.bf16.mxu0 0
    %2932 = vmatpush1.bf16.msra.mxu0 %v2841
    %2933 = vmatprep.subr.bf16.mxu0 0
    %2934 = vmatpush1.bf16.msra.mxu0 %v2842
    %2935 = vmatprep.subr.bf16.mxu0 0
    %2936 = vmatpush1.bf16.msra.mxu0 %v2843
    %2937 = vmatprep.subr.bf16.mxu0 0
    %2938 = vmatpush1.bf16.msra.mxu0 %v2844
    %2939 = vmatprep.subr.bf16.mxu0 0
    %2940 = vmatpush1.bf16.msra.mxu0 %v2845
    %2941 = vmatprep.subr.bf16.mxu0 0
    %2942 = vmatpush1.bf16.msra.mxu0 %v2846
    %2943 = vmatprep.subr.bf16.mxu0 0
    %2944 = vmatpush1.bf16.msra.mxu0 %v2847
    %2945 = vmatprep.subr.bf16.mxu0 0
    %2946 = vmatpush1.bf16.msra.mxu0 %v2848
    %2947 = vmatprep.subr.bf16.mxu0 0
    %2948 = vmatpush1.bf16.msra.mxu0 %v2849
    %2949 = vmatprep.subr.bf16.mxu0 0
    %2950 = vmatpush1.bf16.msra.mxu0 %v2850
    %2951 = vmatprep.subr.bf16.mxu0 0
    %2952 = vmatpush1.bf16.msra.mxu0 %v2851
    %2953 = vmatprep.subr.bf16.mxu0 0
    %2954 = vmatpush1.bf16.msra.mxu0 %v2852
    %2955 = vmatprep.subr.bf16.mxu0 0
    %2956 = vmatpush1.bf16.msra.mxu0 %v2853
    %2957 = vmatprep.subr.bf16.mxu0 0
    %2958 = vmatpush1.bf16.msra.mxu0 %v2854
    %2959 = vmatprep.subr.bf16.mxu0 0
    %2960 = vmatpush1.bf16.msra.mxu0 %v2855
    %2961 = vmatprep.mubr.bf16.mxu0 %v2624
    %2962 = vmatmul.mubr.bf16.gmra.mrb[0].mxu0 %v2623
    %v2963 = vpop.f32.mrb[0].mxu0
    %v2964 = vadd.f32 %v2923, %v2963
    %v2965 = vpop.f32.mrb[0].mxu0
    %v2966 = vpop.f32.mrb[0].mxu0
    %v2967 = vadd.f32 %v2926, %v2966
    %v2968 = vpop.f32.mrb[0].mxu0
    %2969 = vdwg.mxu0
    %v2970 = vmul.f32 %v2964, 0.5
    %v2971 = vmul.f32 %v2967, 0.5
    %v2972 = vtanh.pop %v2970
    %v2973 = vtanh.pop %v2971
    %v2974 = vmul.f32 %v2972, 0.5
    %v2975 = vmul.f32 %v2973, 0.5
    %v2976 = vadd.f32 %v2974, 0.5
    %v2977 = vadd.f32 %v2975, 0.5
    %v2978 = vpack.c.bf16 %v2977, %v2976
    %v2980 = vunpack.c.l.b16 %v2978
    %v2981 = vunpack.c.h.b16 %v2978
    %v2982 = vpack.c.b16 %v2980, %v2980
    %v2983 = vpack.c.b16 %v2981, %v2981
    %2986 = vst [vmem:[%s7] sm:$0xf] %v2982
    %2987 = vst [vmem:[%s7 + $0x4] sm:$0xf] %v2983
    // Predicated region
    $region38: #{neural_network_forward.1} parent=1 // pred_check
      _
    $region39: #{neural_network_forward.1} parent=1 // pred_check_branch
      %2989 = sbr.rel (0) target = $region41
    $region40: #{neural_network_forward.1} parent=1 // pred_region
      _
    $region41: #{neural_network_forward.1} parent=1 // pred_fallthru
      _
    // Predicated region
    $region42: #{neural_network_forward.1} parent=1 // pred_check
      _
    $region43: #{neural_network_forward.1} parent=1 // pred_check_branch
      %2991 = sbr.rel (0) target = $region45
    $region44: #{neural_network_forward.1} parent=1 // pred_region
      _
    $region45: #{neural_network_forward.1} parent=1 // pred_fallthru
      _
    %2992 = vsyncpa [#allocation3], 1
    %2993 = vsyncpa [#allocation5], 1

</llo_original>
